<compile_context>
chip_gen: v7x
topology: tpu7x:2x2x1
jax: 0.10.0
libtpu: 0.0.40
codegen_flags: <defaults>
</compile_context>

<pallas_src>
import math
from functools import partial

import jax
import jax.numpy as jnp
from jax import lax
from jax.experimental import pallas as pl
from jax.experimental.pallas import tpu as pltpu  # noqa: F401  (TPU backend)


def _nt_dot(a, b):
    """a @ b.T on the MXU without materializing the transpose."""
    return lax.dot_general(a, b, (((1,), (1,)), ((), ())),
                           preferred_element_type=jnp.float32)


# ---------------------------------------------------------------- kernel ----

def _fused_mha_sigmoid_kernel(x_ref, wqkv_ref, bqkv_ref, wo_ref, bo_ref, o_ref,
                              *, num_heads, batch):
    """Fused MHA + sigmoid.

    x_ref    : (L*N, E)  rows in natural (l, n) order (row r -> batch n = r % N)
    wqkv_ref : (3E, E)   PyTorch in_proj_weight, unmodified
    bqkv_ref : (1, 3E)
    wo_ref   : (E, E)    PyTorch out_proj.weight, unmodified
    bo_ref   : (1, E)
    o_ref    : (L*N, E)
    """
    LN, E = x_ref.shape
    H, N = num_heads, batch
    hd = E // H
    scale = 1.0 / math.sqrt(hd)

    x = x_ref[...]
    wo = wo_ref[...]

    # Fused QKV projection: (L*N, E) @ (E, 3E) + bias, weight consumed as-is.
    qkv = _nt_dot(x, wqkv_ref[...]) + bqkv_ref[...]               # (LN, 3E)

    # Rows keep their (l, n) interleaved order; attention may only mix rows of
    # the same batch element, so mask out cross-batch score entries instead of
    # reordering data (no transposes, no concatenates).
    row_b = lax.broadcasted_iota(jnp.int32, (LN, LN), 0) % N
    col_b = lax.broadcasted_iota(jnp.int32, (LN, LN), 1) % N
    same_batch = row_b == col_b

    # Per-head attention; the out-projection is fused as an accumulation over
    # heads (y = sum_h ctx_h @ Wo[:, h*hd:(h+1)*hd].T + bo).
    acc = jnp.zeros((LN, E), jnp.float32)
    for h in range(H):
        c0 = h * hd
        q_h = qkv[:, c0:c0 + hd] * scale                          # (LN, hd)
        k_h = qkv[:, E + c0:E + c0 + hd]                          # (LN, hd)
        v_h = qkv[:, 2 * E + c0:2 * E + c0 + hd]                  # (LN, hd)

        s = _nt_dot(q_h, k_h)                                     # (LN, LN)
        s = jnp.where(same_batch, s, -1e30)
        m = jnp.max(s, axis=-1, keepdims=True)
        p = jnp.exp(s - m)
        p = p / jnp.sum(p, axis=-1, keepdims=True)                # exact softmax
        ctx_h = jnp.dot(p, v_h, preferred_element_type=jnp.float32)

        acc = acc + _nt_dot(ctx_h, wo[:, c0:c0 + hd])             # out-proj slice

    o_ref[...] = jax.nn.sigmoid(acc + bo_ref[...])


# --------------------------------------------------------------- wrapper ----

@partial(jax.jit, static_argnames=("num_heads",))
def model_forward(x1, x2, x3, in_proj_w, in_proj_b, out_proj_w, out_proj_b,
                  *, num_heads):
    """Multihead attention (query=key=value=x1) followed by sigmoid."""
    # The PyTorch reference sets x2 = x1.clone() and x3 = 1 (not a valid value
    # tensor); following that, Q/K/V all come from x1, which lets the three
    # input projections collapse into a single (L*N, E) @ (E, 3E) matmul.
    del x2, x3
    L, N, E = x1.shape

    # Contiguous reshapes only (XLA bitcasts: no data movement, no extra ops).
    x2d = x1.astype(jnp.float32).reshape(L * N, E)
    bqkv = in_proj_b.reshape(1, 3 * E)
    bo = out_proj_b.reshape(1, E)

    kernel = partial(_fused_mha_sigmoid_kernel, num_heads=num_heads, batch=N)

    out = pl.pallas_call(           # no grid: single full-block VMEM invocation
        kernel,
        out_shape=jax.ShapeDtypeStruct((L * N, E), jnp.float32),
    )(x2d, in_proj_w, bqkv, out_proj_w, bo)

    # TODO(synk): source module's `v3 = v4 + v5; return v6` references
    # undefined names (v4, v5, v6); returning v2 = sigmoid(attn_output).
    return out.reshape(L, N, E)


# ------------------------------------------------------------------- main ---

if __name__ == "__main__":
    L, N, E, H = 8, 2, 32, 4          # seq, batch, d_model, num_heads

    key = jax.random.PRNGKey(0)
    kx, kw_in, kw_out = jax.random.split(key, 3)

    x1 = jax.random.normal(kx, (L, N, E), jnp.float32)
    x2 = x1                            # torch: x2 = x1.clone()
    x3 = x2                            # torch passed x3=1 (invalid); use a tensor

    # deterministic parameter init (xavier-ish scale, zero biases like PyTorch MHA)
    in_proj_w = jax.random.normal(kw_in, (3 * E, E), jnp.float32) / jnp.sqrt(E)
    in_proj_b = jnp.zeros((3 * E,), jnp.float32)
    out_proj_w = jax.random.normal(kw_out, (E, E), jnp.float32) / jnp.sqrt(E)
    out_proj_b = jnp.zeros((E,), jnp.float32)

    out = model_forward(x1, x2, x3, in_proj_w, in_proj_b,
                        out_proj_w, out_proj_b, num_heads=H)
    jax.block_until_ready(out)
    assert out.shape == (L, N, E)
    assert bool(jnp.isfinite(out).all())
    print("KERNEL_OK")
</pallas_src>

<mosaic_0001>
module attributes {stable_mosaic.version = 11 : i64} {
  func.func @_fused_mha_sigmoid_kernel(%arg0: memref<16x32xf32, #tpu.memory_space<vmem>>, %arg1: memref<96x32xf32, #tpu.memory_space<vmem>>, %arg2: memref<1x96xf32, #tpu.memory_space<vmem>>, %arg3: memref<32x32xf32, #tpu.memory_space<vmem>>, %arg4: memref<1x32xf32, #tpu.memory_space<vmem>>, %arg5: memref<16x32xf32, #tpu.memory_space<vmem>>) attributes {dimension_semantics = [], scalar_prefetch = 0 : i64, scratch_operands = 0 : i64, tpu.core_type = #tpu.core_type<tc>} {
    %c0 = arith.constant 0 : index
    %c0_0 = arith.constant 0 : index
    %0 = vector.load %arg0[%c0, %c0_0] : memref<16x32xf32, #tpu.memory_space<vmem>>, vector<16x32xf32>
    %c0_1 = arith.constant 0 : index
    %c0_2 = arith.constant 0 : index
    %1 = vector.load %arg3[%c0_1, %c0_2] : memref<32x32xf32, #tpu.memory_space<vmem>>, vector<32x32xf32>
    %c0_3 = arith.constant 0 : index
    %c0_4 = arith.constant 0 : index
    %2 = vector.load %arg1[%c0_3, %c0_4] : memref<96x32xf32, #tpu.memory_space<vmem>>, vector<96x32xf32>
    %cst = arith.constant dense<0.000000e+00> : vector<16x96xf32>
    %3 = tpu.matmul %0, %2, %cst {dimension_numbers = #tpu.dot_dimension_numbers<[1], [1], [0], [0], [0, 0, 1, 0], [], []>} : vector<16x32xf32>, vector<96x32xf32>, vector<16x96xf32> -> vector<16x96xf32>
    %c0_5 = arith.constant 0 : index
    %c0_6 = arith.constant 0 : index
    %4 = vector.load %arg2[%c0_5, %c0_6] : memref<1x96xf32, #tpu.memory_space<vmem>>, vector<1x96xf32>
    %5 = vector.broadcast %4 : vector<1x96xf32> to vector<16x96xf32>
    %6 = arith.addf %3, %5 : vector<16x96xf32>
    %7 = tpu.iota {dimensions = array<i32: 0>} : vector<16x16xi32>
    %c2_i32 = arith.constant 2 : i32
    %c0_i32 = arith.constant 0 : i32
    %8 = arith.cmpi eq, %c2_i32, %c0_i32 : i32
    %c1_i32 = arith.constant 1 : i32
    %9 = arith.select %8, %c1_i32, %c2_i32 : i32
    %10 = vector.broadcast %9 : i32 to vector<16x16xi32>
    %11 = arith.remsi %7, %10 : vector<16x16xi32>
    %c0_i32_7 = arith.constant 0 : i32
    %12 = vector.broadcast %c0_i32_7 : i32 to vector<16x16xi32>
    %13 = arith.cmpi ne, %11, %12 : vector<16x16xi32>
    %c0_i32_8 = arith.constant 0 : i32
    %14 = vector.broadcast %c0_i32_8 : i32 to vector<16x16xi32>
    %15 = arith.cmpi slt, %11, %14 : vector<16x16xi32>
    %c0_i32_9 = arith.constant 0 : i32
    %16 = arith.cmpi slt, %9, %c0_i32_9 : i32
    %17 = vector.broadcast %16 : i1 to vector<16x16xi1>
    %18 = vector.broadcast %17 : vector<16x16xi1> to vector<16x16xi1>
    %19 = arith.xori %15, %18 : vector<16x16xi1>
    %20 = arith.andi %19, %13 : vector<16x16xi1>
    %21 = vector.broadcast %9 : i32 to vector<16x16xi32>
    %22 = arith.addi %11, %21 : vector<16x16xi32>
    %23 = arith.select %20, %22, %11 : vector<16x16xi1>, vector<16x16xi32>
    %24 = tpu.iota {dimensions = array<i32: 1>} : vector<16x16xi32>
    %c2_i32_10 = arith.constant 2 : i32
    %c0_i32_11 = arith.constant 0 : i32
    %25 = arith.cmpi eq, %c2_i32_10, %c0_i32_11 : i32
    %c1_i32_12 = arith.constant 1 : i32
    %26 = arith.select %25, %c1_i32_12, %c2_i32_10 : i32
    %27 = vector.broadcast %26 : i32 to vector<16x16xi32>
    %28 = arith.remsi %24, %27 : vector<16x16xi32>
    %c0_i32_13 = arith.constant 0 : i32
    %29 = vector.broadcast %c0_i32_13 : i32 to vector<16x16xi32>
    %30 = arith.cmpi ne, %28, %29 : vector<16x16xi32>
    %c0_i32_14 = arith.constant 0 : i32
    %31 = vector.broadcast %c0_i32_14 : i32 to vector<16x16xi32>
    %32 = arith.cmpi slt, %28, %31 : vector<16x16xi32>
    %c0_i32_15 = arith.constant 0 : i32
    %33 = arith.cmpi slt, %26, %c0_i32_15 : i32
    %34 = vector.broadcast %33 : i1 to vector<16x16xi1>
    %35 = vector.broadcast %34 : vector<16x16xi1> to vector<16x16xi1>
    %36 = arith.xori %32, %35 : vector<16x16xi1>
    %37 = arith.andi %36, %30 : vector<16x16xi1>
    %38 = vector.broadcast %26 : i32 to vector<16x16xi32>
    %39 = arith.addi %28, %38 : vector<16x16xi32>
    %40 = arith.select %37, %39, %28 : vector<16x16xi1>, vector<16x16xi32>
    %41 = arith.cmpi eq, %23, %40 : vector<16x16xi32>
    %cst_16 = arith.constant 0.000000e+00 : f32
    %42 = vector.broadcast %cst_16 : f32 to vector<16x32xf32>
    %43 = vector.extract_strided_slice %6 {offsets = [0, 0], sizes = [16, 8], strides = [1, 1]} : vector<16x96xf32> to vector<16x8xf32>
    %cst_17 = arith.constant 0.353553385 : f32
    %44 = vector.broadcast %cst_17 : f32 to vector<16x8xf32>
    %45 = arith.mulf %43, %44 : vector<16x8xf32>
    %46 = vector.extract_strided_slice %6 {offsets = [0, 32], sizes = [16, 8], strides = [1, 1]} : vector<16x96xf32> to vector<16x8xf32>
    %47 = vector.extract_strided_slice %6 {offsets = [0, 64], sizes = [16, 8], strides = [1, 1]} : vector<16x96xf32> to vector<16x8xf32>
    %cst_18 = arith.constant dense<0.000000e+00> : vector<16x16xf32>
    %48 = tpu.matmul %45, %46, %cst_18 {dimension_numbers = #tpu.dot_dimension_numbers<[1], [1], [0], [0], [0, 0, 1, 0], [], []>} : vector<16x8xf32>, vector<16x8xf32>, vector<16x16xf32> -> vector<16x16xf32>
    %cst_19 = arith.constant -1.000000e+30 : f32
    %49 = vector.broadcast %cst_19 : f32 to vector<16x16xf32>
    %50 = arith.select %41, %48, %49 : vector<16x16xi1>, vector<16x16xf32>
    %cst_20 = arith.constant dense<0xFF800000> : vector<16xf32>
    %51 = vector.multi_reduction <maximumf>, %50, %cst_20 [1] : vector<16x16xf32> to vector<16xf32>
    %52 = vector.shape_cast %51 : vector<16xf32> to vector<16x1xf32>
    %53 = vector.broadcast %52 : vector<16x1xf32> to vector<16x16xf32>
    %54 = arith.subf %50, %53 : vector<16x16xf32>
    %55 = math.exp %54 : vector<16x16xf32>
    %cst_21 = arith.constant dense<0.000000e+00> : vector<16xf32>
    %56 = vector.multi_reduction <add>, %55, %cst_21 [1] : vector<16x16xf32> to vector<16xf32>
    %57 = vector.shape_cast %56 : vector<16xf32> to vector<16x1xf32>
    %58 = vector.broadcast %57 : vector<16x1xf32> to vector<16x16xf32>
    %59 = arith.divf %55, %58 : vector<16x16xf32>
    %cst_22 = arith.constant dense<0.000000e+00> : vector<16x8xf32>
    %60 = tpu.matmul %59, %47, %cst_22 {dimension_numbers = #tpu.dot_dimension_numbers<[1], [0], [0], [1], [0, 0, 1, 1], [], []>} : vector<16x16xf32>, vector<16x8xf32>, vector<16x8xf32> -> vector<16x8xf32>
    %61 = vector.extract_strided_slice %1 {offsets = [0, 0], sizes = [32, 8], strides = [1, 1]} : vector<32x32xf32> to vector<32x8xf32>
    %cst_23 = arith.constant dense<0.000000e+00> : vector<16x32xf32>
    %62 = tpu.matmul %60, %61, %cst_23 {dimension_numbers = #tpu.dot_dimension_numbers<[1], [1], [0], [0], [0, 0, 1, 0], [], []>} : vector<16x8xf32>, vector<32x8xf32>, vector<16x32xf32> -> vector<16x32xf32>
    %63 = arith.addf %42, %62 : vector<16x32xf32>
    %64 = vector.extract_strided_slice %6 {offsets = [0, 8], sizes = [16, 8], strides = [1, 1]} : vector<16x96xf32> to vector<16x8xf32>
    %cst_24 = arith.constant 0.353553385 : f32
    %65 = vector.broadcast %cst_24 : f32 to vector<16x8xf32>
    %66 = arith.mulf %64, %65 : vector<16x8xf32>
    %67 = vector.extract_strided_slice %6 {offsets = [0, 40], sizes = [16, 8], strides = [1, 1]} : vector<16x96xf32> to vector<16x8xf32>
    %68 = vector.extract_strided_slice %6 {offsets = [0, 72], sizes = [16, 8], strides = [1, 1]} : vector<16x96xf32> to vector<16x8xf32>
    %cst_25 = arith.constant dense<0.000000e+00> : vector<16x16xf32>
    %69 = tpu.matmul %66, %67, %cst_25 {dimension_numbers = #tpu.dot_dimension_numbers<[1], [1], [0], [0], [0, 0, 1, 0], [], []>} : vector<16x8xf32>, vector<16x8xf32>, vector<16x16xf32> -> vector<16x16xf32>
    %cst_26 = arith.constant -1.000000e+30 : f32
    %70 = vector.broadcast %cst_26 : f32 to vector<16x16xf32>
    %71 = arith.select %41, %69, %70 : vector<16x16xi1>, vector<16x16xf32>
    %cst_27 = arith.constant dense<0xFF800000> : vector<16xf32>
    %72 = vector.multi_reduction <maximumf>, %71, %cst_27 [1] : vector<16x16xf32> to vector<16xf32>
    %73 = vector.shape_cast %72 : vector<16xf32> to vector<16x1xf32>
    %74 = vector.broadcast %73 : vector<16x1xf32> to vector<16x16xf32>
    %75 = arith.subf %71, %74 : vector<16x16xf32>
    %76 = math.exp %75 : vector<16x16xf32>
    %cst_28 = arith.constant dense<0.000000e+00> : vector<16xf32>
    %77 = vector.multi_reduction <add>, %76, %cst_28 [1] : vector<16x16xf32> to vector<16xf32>
    %78 = vector.shape_cast %77 : vector<16xf32> to vector<16x1xf32>
    %79 = vector.broadcast %78 : vector<16x1xf32> to vector<16x16xf32>
    %80 = arith.divf %76, %79 : vector<16x16xf32>
    %cst_29 = arith.constant dense<0.000000e+00> : vector<16x8xf32>
    %81 = tpu.matmul %80, %68, %cst_29 {dimension_numbers = #tpu.dot_dimension_numbers<[1], [0], [0], [1], [0, 0, 1, 1], [], []>} : vector<16x16xf32>, vector<16x8xf32>, vector<16x8xf32> -> vector<16x8xf32>
    %82 = vector.extract_strided_slice %1 {offsets = [0, 8], sizes = [32, 8], strides = [1, 1]} : vector<32x32xf32> to vector<32x8xf32>
    %cst_30 = arith.constant dense<0.000000e+00> : vector<16x32xf32>
    %83 = tpu.matmul %81, %82, %cst_30 {dimension_numbers = #tpu.dot_dimension_numbers<[1], [1], [0], [0], [0, 0, 1, 0], [], []>} : vector<16x8xf32>, vector<32x8xf32>, vector<16x32xf32> -> vector<16x32xf32>
    %84 = arith.addf %63, %83 : vector<16x32xf32>
    %85 = vector.extract_strided_slice %6 {offsets = [0, 16], sizes = [16, 8], strides = [1, 1]} : vector<16x96xf32> to vector<16x8xf32>
    %cst_31 = arith.constant 0.353553385 : f32
    %86 = vector.broadcast %cst_31 : f32 to vector<16x8xf32>
    %87 = arith.mulf %85, %86 : vector<16x8xf32>
    %88 = vector.extract_strided_slice %6 {offsets = [0, 48], sizes = [16, 8], strides = [1, 1]} : vector<16x96xf32> to vector<16x8xf32>
    %89 = vector.extract_strided_slice %6 {offsets = [0, 80], sizes = [16, 8], strides = [1, 1]} : vector<16x96xf32> to vector<16x8xf32>
    %cst_32 = arith.constant dense<0.000000e+00> : vector<16x16xf32>
    %90 = tpu.matmul %87, %88, %cst_32 {dimension_numbers = #tpu.dot_dimension_numbers<[1], [1], [0], [0], [0, 0, 1, 0], [], []>} : vector<16x8xf32>, vector<16x8xf32>, vector<16x16xf32> -> vector<16x16xf32>
    %cst_33 = arith.constant -1.000000e+30 : f32
    %91 = vector.broadcast %cst_33 : f32 to vector<16x16xf32>
    %92 = arith.select %41, %90, %91 : vector<16x16xi1>, vector<16x16xf32>
    %cst_34 = arith.constant dense<0xFF800000> : vector<16xf32>
    %93 = vector.multi_reduction <maximumf>, %92, %cst_34 [1] : vector<16x16xf32> to vector<16xf32>
    %94 = vector.shape_cast %93 : vector<16xf32> to vector<16x1xf32>
    %95 = vector.broadcast %94 : vector<16x1xf32> to vector<16x16xf32>
    %96 = arith.subf %92, %95 : vector<16x16xf32>
    %97 = math.exp %96 : vector<16x16xf32>
    %cst_35 = arith.constant dense<0.000000e+00> : vector<16xf32>
    %98 = vector.multi_reduction <add>, %97, %cst_35 [1] : vector<16x16xf32> to vector<16xf32>
    %99 = vector.shape_cast %98 : vector<16xf32> to vector<16x1xf32>
    %100 = vector.broadcast %99 : vector<16x1xf32> to vector<16x16xf32>
    %101 = arith.divf %97, %100 : vector<16x16xf32>
    %cst_36 = arith.constant dense<0.000000e+00> : vector<16x8xf32>
    %102 = tpu.matmul %101, %89, %cst_36 {dimension_numbers = #tpu.dot_dimension_numbers<[1], [0], [0], [1], [0, 0, 1, 1], [], []>} : vector<16x16xf32>, vector<16x8xf32>, vector<16x8xf32> -> vector<16x8xf32>
    %103 = vector.extract_strided_slice %1 {offsets = [0, 16], sizes = [32, 8], strides = [1, 1]} : vector<32x32xf32> to vector<32x8xf32>
    %cst_37 = arith.constant dense<0.000000e+00> : vector<16x32xf32>
    %104 = tpu.matmul %102, %103, %cst_37 {dimension_numbers = #tpu.dot_dimension_numbers<[1], [1], [0], [0], [0, 0, 1, 0], [], []>} : vector<16x8xf32>, vector<32x8xf32>, vector<16x32xf32> -> vector<16x32xf32>
    %105 = arith.addf %84, %104 : vector<16x32xf32>
    %106 = vector.extract_strided_slice %6 {offsets = [0, 24], sizes = [16, 8], strides = [1, 1]} : vector<16x96xf32> to vector<16x8xf32>
    %cst_38 = arith.constant 0.353553385 : f32
    %107 = vector.broadcast %cst_38 : f32 to vector<16x8xf32>
    %108 = arith.mulf %106, %107 : vector<16x8xf32>
    %109 = vector.extract_strided_slice %6 {offsets = [0, 56], sizes = [16, 8], strides = [1, 1]} : vector<16x96xf32> to vector<16x8xf32>
    %110 = vector.extract_strided_slice %6 {offsets = [0, 88], sizes = [16, 8], strides = [1, 1]} : vector<16x96xf32> to vector<16x8xf32>
    %cst_39 = arith.constant dense<0.000000e+00> : vector<16x16xf32>
    %111 = tpu.matmul %108, %109, %cst_39 {dimension_numbers = #tpu.dot_dimension_numbers<[1], [1], [0], [0], [0, 0, 1, 0], [], []>} : vector<16x8xf32>, vector<16x8xf32>, vector<16x16xf32> -> vector<16x16xf32>
    %cst_40 = arith.constant -1.000000e+30 : f32
    %112 = vector.broadcast %cst_40 : f32 to vector<16x16xf32>
    %113 = arith.select %41, %111, %112 : vector<16x16xi1>, vector<16x16xf32>
    %cst_41 = arith.constant dense<0xFF800000> : vector<16xf32>
    %114 = vector.multi_reduction <maximumf>, %113, %cst_41 [1] : vector<16x16xf32> to vector<16xf32>
    %115 = vector.shape_cast %114 : vector<16xf32> to vector<16x1xf32>
    %116 = vector.broadcast %115 : vector<16x1xf32> to vector<16x16xf32>
    %117 = arith.subf %113, %116 : vector<16x16xf32>
    %118 = math.exp %117 : vector<16x16xf32>
    %cst_42 = arith.constant dense<0.000000e+00> : vector<16xf32>
    %119 = vector.multi_reduction <add>, %118, %cst_42 [1] : vector<16x16xf32> to vector<16xf32>
    %120 = vector.shape_cast %119 : vector<16xf32> to vector<16x1xf32>
    %121 = vector.broadcast %120 : vector<16x1xf32> to vector<16x16xf32>
    %122 = arith.divf %118, %121 : vector<16x16xf32>
    %cst_43 = arith.constant dense<0.000000e+00> : vector<16x8xf32>
    %123 = tpu.matmul %122, %110, %cst_43 {dimension_numbers = #tpu.dot_dimension_numbers<[1], [0], [0], [1], [0, 0, 1, 1], [], []>} : vector<16x16xf32>, vector<16x8xf32>, vector<16x8xf32> -> vector<16x8xf32>
    %124 = vector.extract_strided_slice %1 {offsets = [0, 24], sizes = [32, 8], strides = [1, 1]} : vector<32x32xf32> to vector<32x8xf32>
    %cst_44 = arith.constant dense<0.000000e+00> : vector<16x32xf32>
    %125 = tpu.matmul %123, %124, %cst_44 {dimension_numbers = #tpu.dot_dimension_numbers<[1], [1], [0], [0], [0, 0, 1, 0], [], []>} : vector<16x8xf32>, vector<32x8xf32>, vector<16x32xf32> -> vector<16x32xf32>
    %126 = arith.addf %105, %125 : vector<16x32xf32>
    %c0_45 = arith.constant 0 : index
    %c0_46 = arith.constant 0 : index
    %127 = vector.load %arg4[%c0_45, %c0_46] : memref<1x32xf32, #tpu.memory_space<vmem>>, vector<1x32xf32>
    %128 = vector.broadcast %127 : vector<1x32xf32> to vector<16x32xf32>
    %129 = arith.addf %126, %128 : vector<16x32xf32>
    %130 = arith.negf %129 : vector<16x32xf32>
    %131 = math.exp %130 : vector<16x32xf32>
    %cst_47 = arith.constant 1.000000e+00 : f32
    %132 = vector.broadcast %cst_47 : f32 to vector<16x32xf32>
    %133 = arith.addf %132, %131 : vector<16x32xf32>
    %134 = arith.divf %132, %133 : vector<16x32xf32>
    %c0_48 = arith.constant 0 : index
    %c0_49 = arith.constant 0 : index
    %135 = vector.load %arg5[%c0_48, %c0_49] : memref<16x32xf32, #tpu.memory_space<vmem>>, vector<16x32xf32>
    tpu.vector_store %arg5[%c0_48, %c0_49], %134 {strides = array<i32>} : memref<16x32xf32, #tpu.memory_space<vmem>>, vector<16x32xf32>,
    return
  }
}

</mosaic_0001>

<llo_original>
// kernel: model_forward.1
$region0: #{model_forward.1}
  #allocation0 [shape = 'u32[]', space=smem, size = 0x4, offset = 0x4, fixed_abs, tag = 'smem constant byte address 0x4 - core index']
  #allocation1 [shape = 'u32[144,128]{1,0:T(1,128)}', space=vmem, size = 0x12000, scoped, tag = 'internal scratch']
  %s0 = inlined_call_operand.vmem [shape: f32[16,32], index: 0, kind: input, shape index: {}]
  %s1 = inlined_call_operand.vmem [shape: f32[96,32], index: 1, kind: input, shape index: {}]
  %s2 = inlined_call_operand.vmem [shape: f32[1,96], index: 2, kind: input, shape index: {}]
  %s3 = inlined_call_operand.vmem [shape: f32[32,32], index: 3, kind: input, shape index: {}]
  %s4 = inlined_call_operand.vmem [shape: f32[1,32], index: 4, kind: input, shape index: {}]
  %s5 = inlined_call_operand.hbm [shape: f32[16,32], index: 5, kind: output, shape index: {}]
  %s6 = sld [smem:[#allocation0]]
  $region30: #{model_forward.1} parent=0
    _
  %s8 = ssub.s32 1, %s6
  %s9 = scalar_select 0, %s8, %s6
  $region1: #{model_forward.1} parent=0
    #allocation2 [shape = 'u8[8192]{0}', space=vmem, size = 0x2000, scoped, tag = 'output window, operand 0, single buffered']
    #allocation3 [shape = 's32[1]{0}', space=sflag, size = 0x4, scoped, tag = 'scoped memory for model_forward.1']
    %10 = vsyncpa [#allocation3], 0
    // Predicated region
    $region2: #{model_forward.1} parent=1 // pred_check
      _
    $region3: #{model_forward.1} parent=1 // pred_check_branch
      %12 = sbr.rel (0) target = $region5
    $region4: #{model_forward.1} parent=1 // pred_region
      _
    $region5: #{model_forward.1} parent=1 // pred_fallthru
      _
    // Predicated region
    $region6: #{model_forward.1} parent=1 // pred_check
      _
    $region7: #{model_forward.1} parent=1 // pred_check_branch
      %14 = sbr.rel (0) target = $region9
    $region8: #{model_forward.1} parent=1 // pred_region
      _
    $region9: #{model_forward.1} parent=1 // pred_fallthru
      _
    // Predicated region
    $region10: #{model_forward.1} parent=1 // pred_check
      _
    $region11: #{model_forward.1} parent=1 // pred_check_branch
      %16 = sbr.rel (0) target = $region13
    $region12: #{model_forward.1} parent=1 // pred_region
      _
    $region13: #{model_forward.1} parent=1 // pred_fallthru
      _
    // Predicated region
    $region14: #{model_forward.1} parent=1 // pred_check
      _
    $region15: #{model_forward.1} parent=1 // pred_check_branch
      %18 = sbr.rel (0) target = $region17
    $region16: #{model_forward.1} parent=1 // pred_region
      _
    $region17: #{model_forward.1} parent=1 // pred_fallthru
      _
    // Predicated region
    $region18: #{model_forward.1} parent=1 // pred_check
      _
    $region19: #{model_forward.1} parent=1 // pred_check_branch
      %20 = sbr.rel (0) target = $region21
    $region20: #{model_forward.1} parent=1 // pred_region
      _
    $region21: #{model_forward.1} parent=1 // pred_fallthru
      _
    %v21 = vld [vmem:[%s0] sm:$0xff]
    %v22 = vld [vmem:[%s0 + $0x8] sm:$0xff]
    %v23 = vld [vmem:[%s3] sm:$0xff]
    %v24 = vld [vmem:[%s3 + $0x8] sm:$0xff]
    %v25 = vld [vmem:[%s3 + $0x10] sm:$0xff]
    %v26 = vld [vmem:[%s3 + $0x18] sm:$0xff]
    %v27 = vld [vmem:[%s1] sm:$0xff]
    %v28 = vld [vmem:[%s1 + $0x8] sm:$0xff]
    %v29 = vld [vmem:[%s1 + $0x10] sm:$0xff]
    %v30 = vld [vmem:[%s1 + $0x18] sm:$0xff]
    %v31 = vld [vmem:[%s1 + $0x20] sm:$0xff]
    %v32 = vld [vmem:[%s1 + $0x28] sm:$0xff]
    %v33 = vld [vmem:[%s1 + $0x30] sm:$0xff]
    %v34 = vld [vmem:[%s1 + $0x38] sm:$0xff]
    %v35 = vld [vmem:[%s1 + $0x40] sm:$0xff]
    %v36 = vld [vmem:[%s1 + $0x48] sm:$0xff]
    %v37 = vld [vmem:[%s1 + $0x50] sm:$0xff]
    %v38 = vld [vmem:[%s1 + $0x58] sm:$0xff]
    %v39 = vld [vmem:[%s2] sm:$0x1]
    %v41 = vlaneseq
    %v42 = vshrl.u32 %v41, 7
    %v43 = vsub.s32 0, %v42
    %v44 = vrot.slane %v39, %v43
    %vm46 = vcmask 261120
    %v48 = vsel %vm46, %v21, 0
    %v51 = vsel %vm46, %v22, 0
    %v54 = vsel %vm46, %v27, 0
    %v57 = vsel %vm46, %v28, 0
    %v60 = vsel %vm46, %v29, 0
    %v63 = vsel %vm46, %v30, 0
    %v66 = vsel %vm46, %v31, 0
    %v69 = vsel %vm46, %v32, 0
    %v72 = vsel %vm46, %v33, 0
    %v75 = vsel %vm46, %v34, 0
    %v78 = vsel %vm46, %v35, 0
    %v81 = vsel %vm46, %v36, 0
    %v84 = vsel %vm46, %v37, 0
    %v87 = vsel %vm46, %v38, 0
    %89 = vmatprep.subr.mxu0 0.0
    %90 = vmatpush1.xpose.msra.mxu0 %v54
    %91 = vmatprep.subr.mxu0 0.0
    %92 = vmatpush1.xpose.msra.mxu0 %v57
    %93 = vmatprep.subr.mxu0 0.0
    %94 = vmatpush1.xpose.msra.mxu0 %v60
    %95 = vmatprep.subr.mxu0 0.0
    %96 = vmatpush1.xpose.msra.mxu0 %v63
    %97 = vmatprep.subr.mxu0 0.0
    %98 = vmatpush1.xpose.msra.mxu0 %v66
    %99 = vmatprep.subr.mxu0 0.0
    %100 = vmatpush1.xpose.msra.mxu0 %v69
    %101 = vmatprep.subr.mxu0 0.0
    %102 = vmatpush1.xpose.msra.mxu0 %v72
    %103 = vmatprep.subr.mxu0 0.0
    %104 = vmatpush1.xpose.msra.mxu0 %v75
    %105 = vmatprep.subr.mxu0 0.0
    %106 = vmatpush1.xpose.msra.mxu0 %v78
    %107 = vmatprep.subr.mxu0 0.0
    %108 = vmatpush1.xpose.msra.mxu0 %v81
    %109 = vmatprep.subr.mxu0 0.0
    %110 = vmatpush1.xpose.msra.mxu0 %v84
    %111 = vmatprep.subr.mxu0 0.0
    %112 = vmatpush1.xpose.msra.mxu0 %v87
    %113 = vmatprep.subr.mxu0 0.0
    %114 = vmatpush1.xpose.msra.mxu0 0.0
    %115 = vmatprep.subr.mxu0 0.0
    %116 = vmatpush1.xpose.msra.mxu0 0.0
    %117 = vmatprep.subr.mxu0 0.0
    %118 = vmatpush1.xpose.msra.mxu0 0.0
    %119 = vmatprep.subr.mxu0 0.0
    %120 = vmatpush1.xpose.msra.mxu0 0.0
    %121 = vmatprep.subr.mxu0 0.0
    %122 = vmatpush1.xpose.msra.mxu0 0.0
    %123 = vmatprep.subr.mxu0 0.0
    %124 = vmatpush1.xpose.msra.mxu0 0.0
    %125 = vmatprep.subr.mxu0 0.0
    %126 = vmatpush1.xpose.msra.mxu0 0.0
    %127 = vmatprep.subr.mxu0 0.0
    %128 = vmatpush1.xpose.msra.mxu0 0.0
    %129 = vmatprep.subr.mxu0 0.0
    %130 = vmatpush1.xpose.msra.mxu0 0.0
    %131 = vmatprep.subr.mxu0 0.0
    %132 = vmatpush1.xpose.msra.mxu0 0.0
    %133 = vmatprep.subr.mxu0 0.0
    %134 = vmatpush1.xpose.msra.mxu0 0.0
    %135 = vmatprep.subr.mxu0 0.0
    %136 = vmatpush1.xpose.msra.mxu0 0.0
    %137 = vmatprep.subr.mxu0 0.0
    %138 = vmatpush1.xpose.msra.mxu0 0.0
    %139 = vmatprep.subr.mxu0 0.0
    %140 = vmatpush1.xpose.msra.mxu0 0.0
    %141 = vmatprep.subr.mxu0 0.0
    %142 = vmatpush1.xpose.msra.mxu0 0.0
    %143 = vmatprep.subr.mxu0 0.0
    %144 = vmatpush1.xpose.msra.mxu0 0.0
    %145 = vmatprep.subr.mxu0 0.0
    %146 = vmatpush1.xpose.msra.mxu0 0.0
    %147 = vmatprep.subr.mxu0 0.0
    %148 = vmatpush1.xpose.msra.mxu0 0.0
    %149 = vmatprep.subr.mxu0 0.0
    %150 = vmatpush1.xpose.msra.mxu0 0.0
    %151 = vmatprep.subr.mxu0 0.0
    %152 = vmatpush1.xpose.msra.mxu0 0.0
    %153 = vmatprep.mubr.f32.mxu0 0.0
    %154 = vmatmul.mubr.f32.gmra.mrb[0].mxu0 %v48
    %v155 = vpop.f32.mrb[0].mxu0
    %v156 = vadd.f32 %v44, %v155
    %v157 = vpop.f32.mrb[0].mxu0
    %158 = vmatprep.mubr.f32.mxu0 0.0
    %159 = vmatmul.mubr.f32.gmra.mrb[0].mxu0 %v51
    %v160 = vpop.f32.mrb[0].mxu0
    %v161 = vadd.f32 %v44, %v160
    %v162 = vpop.f32.mrb[0].mxu0
    %163 = vdwg.mxu0
    %v164 = vlaneseq
    %v165 = vshrl.u32 %v164, 7
    %v166 = vadd.s32 %v165, 8
    %vm167 = vcmp.lt.s32.totalorder %v165, 0
    %v168 = vsub.s32 0, %v165
    %v169 = vsel %vm167, %v168, %v165
    %v170 = vshrl.u32 %v169, 1
    %v171 = vand.u32 %v169, 1
    %v172 = vsub.s32 0, %v171
    %v173 = vsel %vm167, %v172, %v171
    %vm174 = vcmp.lt.s32.totalorder %v166, 0
    %v175 = vsub.s32 0, %v166
    %v176 = vsel %vm174, %v175, %v166
    %v177 = vshrl.u32 %v176, 1
    %v178 = vand.u32 %v176, 1
    %v179 = vsub.s32 0, %v178
    %v180 = vsel %vm174, %v179, %v178
    %vm181 = vcmp.ne.s32.totalorder %v173, 0
    %vm182 = vcmp.ne.s32.totalorder %v180, 0
    %vm183 = vcmp.lt.s32.totalorder %v173, 0
    %vm184 = vcmp.lt.s32.totalorder %v180, 0
    %vm185 = vmand %vm183, %vm181
    %vm186 = vmand %vm184, %vm182
    %v187 = vadd.s32 %v173, 2
    %v188 = vadd.s32 %v180, 2
    %v189 = vsel %vm185, %v187, %v173
    %v190 = vsel %vm186, %v188, %v180
    %v191 = vlaneseq
    %v192 = vand.u32 %v191, 127
    %vm193 = vcmp.lt.s32.totalorder %v192, 0
    %v194 = vsub.s32 0, %v192
    %v195 = vsel %vm193, %v194, %v192
    %v196 = vshrl.u32 %v195, 1
    %v197 = vand.u32 %v195, 1
    %v198 = vsub.s32 0, %v197
    %v199 = vsel %vm193, %v198, %v197
    %vm200 = vcmp.ne.s32.totalorder %v199, 0
    %vm201 = vcmp.lt.s32.totalorder %v199, 0
    %vm202 = vmand %vm201, %vm200
    %v203 = vadd.s32 %v199, 2
    %v204 = vsel %vm202, %v203, %v199
    %vm205 = vcmp.eq.s32.totalorder %v189, %v204
    %vm206 = vcmp.eq.s32.totalorder %v190, %v204
    %v207 = vmul.f32 %v156, 0.35355338
    %v208 = vmul.f32 %v161, 0.35355338
    %211 = vrot.lane.b32.xlu0 %v156, 96
    %v212 = vpop.permute.xlu0 %211
    %213 = vrot.lane.b32.xlu0 %v161, 96
    %v214 = vpop.permute.xlu0 %213
    %vm215 = vcmask 64512
    %v217 = vsel %vm215, %v207, 0
    %v220 = vsel %vm215, %v208, 0
    %v222 = vsel %vm215, %v212, 0
    %v224 = vsel %vm215, %v214, 0
    %226 = vmatprep.subr.mxu0 0.0
    %227 = vmatpush1.xpose.msra.mxu0 %v222
    %228 = vmatprep.subr.mxu0 0.0
    %229 = vmatpush1.xpose.msra.mxu0 %v224
    %230 = vmatprep.subr.mxu0 0.0
    %231 = vmatpush1.xpose.msra.mxu0 0.0
    %232 = vmatprep.subr.mxu0 0.0
    %233 = vmatpush1.xpose.msra.mxu0 0.0
    %234 = vmatprep.subr.mxu0 0.0
    %235 = vmatpush1.xpose.msra.mxu0 0.0
    %236 = vmatprep.subr.mxu0 0.0
    %237 = vmatpush1.xpose.msra.mxu0 0.0
    %238 = vmatprep.subr.mxu0 0.0
    %239 = vmatpush1.xpose.msra.mxu0 0.0
    %240 = vmatprep.subr.mxu0 0.0
    %241 = vmatpush1.xpose.msra.mxu0 0.0
    %242 = vmatprep.subr.mxu0 0.0
    %243 = vmatpush1.xpose.msra.mxu0 0.0
    %244 = vmatprep.subr.mxu0 0.0
    %245 = vmatpush1.xpose.msra.mxu0 0.0
    %246 = vmatprep.subr.mxu0 0.0
    %247 = vmatpush1.xpose.msra.mxu0 0.0
    %248 = vmatprep.subr.mxu0 0.0
    %249 = vmatpush1.xpose.msra.mxu0 0.0
    %250 = vmatprep.subr.mxu0 0.0
    %251 = vmatpush1.xpose.msra.mxu0 0.0
    %252 = vmatprep.subr.mxu0 0.0
    %253 = vmatpush1.xpose.msra.mxu0 0.0
    %254 = vmatprep.subr.mxu0 0.0
    %255 = vmatpush1.xpose.msra.mxu0 0.0
    %256 = vmatprep.subr.mxu0 0.0
    %257 = vmatpush1.xpose.msra.mxu0 0.0
    %258 = vmatprep.subr.mxu0 0.0
    %259 = vmatpush1.xpose.msra.mxu0 0.0
    %260 = vmatprep.subr.mxu0 0.0
    %261 = vmatpush1.xpose.msra.mxu0 0.0
    %262 = vmatprep.subr.mxu0 0.0
    %263 = vmatpush1.xpose.msra.mxu0 0.0
    %264 = vmatprep.subr.mxu0 0.0
    %265 = vmatpush1.xpose.msra.mxu0 0.0
    %266 = vmatprep.subr.mxu0 0.0
    %267 = vmatpush1.xpose.msra.mxu0 0.0
    %268 = vmatprep.subr.mxu0 0.0
    %269 = vmatpush1.xpose.msra.mxu0 0.0
    %270 = vmatprep.subr.mxu0 0.0
    %271 = vmatpush1.xpose.msra.mxu0 0.0
    %272 = vmatprep.subr.mxu0 0.0
    %273 = vmatpush1.xpose.msra.mxu0 0.0
    %274 = vmatprep.subr.mxu0 0.0
    %275 = vmatpush1.xpose.msra.mxu0 0.0
    %276 = vmatprep.subr.mxu0 0.0
    %277 = vmatpush1.xpose.msra.mxu0 0.0
    %278 = vmatprep.subr.mxu0 0.0
    %279 = vmatpush1.xpose.msra.mxu0 0.0
    %280 = vmatprep.subr.mxu0 0.0
    %281 = vmatpush1.xpose.msra.mxu0 0.0
    %282 = vmatprep.subr.mxu0 0.0
    %283 = vmatpush1.xpose.msra.mxu0 0.0
    %284 = vmatprep.subr.mxu0 0.0
    %285 = vmatpush1.xpose.msra.mxu0 0.0
    %286 = vmatprep.subr.mxu0 0.0
    %287 = vmatpush1.xpose.msra.mxu0 0.0
    %288 = vmatprep.subr.mxu0 0.0
    %289 = vmatpush1.xpose.msra.mxu0 0.0
    %290 = vmatprep.mubr.f32.mxu0 0.0
    %291 = vmatmul.mubr.f32.gmra.mrb[0].mxu0 %v217
    %v292 = vpop.f32.mrb[0].mxu0
    %v293 = vadd.f32 0.0, %v292
    %v294 = vpop.f32.mrb[0].mxu0
    %295 = vmatprep.mubr.f32.mxu0 0.0
    %296 = vmatmul.mubr.f32.gmra.mrb[0].mxu0 %v220
    %v297 = vpop.f32.mrb[0].mxu0
    %v298 = vadd.f32 0.0, %v297
    %v299 = vpop.f32.mrb[0].mxu0
    %300 = vdwg.mxu0
    %v301 = vsel %vm205, %v293, -1e+30
    %v302 = vsel %vm206, %v298, -1e+30
    %vm303 = vcmask 130048
    %v304 = vsel %vm303, %v301, -inf
    %305 = vmax.xlane.f32.xlu0 %v304
    %v306 = vpop.xlane.xlu0 %305
    %v307 = vsel %vm303, %v302, -inf
    %308 = vmax.xlane.f32.xlu0 %v307
    %v309 = vpop.xlane.xlu0 %308
    %v310 = vsub.f32 %v301, %v306
    %v311 = vsub.f32 %v302, %v309
    %v312 = vmul.f32 %v310, 1.442695
    %v313 = vpow.pop %v312
    %v314 = vmul.f32 %v311, 1.442695
    %v315 = vpow.pop %v314
    %v316 = vsel %vm303, %v313, 0.0
    %317 = vadd.xlane.f32.xlu0 %v316
    %v318 = vpop.xlane.xlu0 %317
    %v319 = vsel %vm303, %v315, 0.0
    %320 = vadd.xlane.f32.xlu0 %v319
    %v321 = vpop.xlane.xlu0 %320
    %v322 = vrcp.pop %v318
    %v323 = vmul.f32 %v313, %v322
    %v324 = vrcp.pop %v321
    %v325 = vmul.f32 %v315, %v324
    %326 = vrot.lane.b32.xlu0 %v156, 64
    %v327 = vpop.permute.xlu0 %326
    %328 = vrot.lane.b32.xlu0 %v161, 64
    %v329 = vpop.permute.xlu0 %328
    %v333 = vsel %vm303, %v323, 0
    %v336 = vsel %vm303, %v325, 0
    %338 = vmatprep.subr.mxu0 0.0
    %339 = vmatpush1.msra.mxu0 %v327
    %340 = vmatprep.subr.mxu0 0.0
    %341 = vmatpush1.msra.mxu0 %v329
    %342 = vmatprep.subr.mxu0 0.0
    %343 = vmatpush1.msra.mxu0 0.0
    %344 = vmatprep.subr.mxu0 0.0
    %345 = vmatpush1.msra.mxu0 0.0
    %346 = vmatprep.subr.mxu0 0.0
    %347 = vmatpush1.msra.mxu0 0.0
    %348 = vmatprep.subr.mxu0 0.0
    %349 = vmatpush1.msra.mxu0 0.0
    %350 = vmatprep.subr.mxu0 0.0
    %351 = vmatpush1.msra.mxu0 0.0
    %352 = vmatprep.subr.mxu0 0.0
    %353 = vmatpush1.msra.mxu0 0.0
    %354 = vmatprep.subr.mxu0 0.0
    %355 = vmatpush1.msra.mxu0 0.0
    %356 = vmatprep.subr.mxu0 0.0
    %357 = vmatpush1.msra.mxu0 0.0
    %358 = vmatprep.subr.mxu0 0.0
    %359 = vmatpush1.msra.mxu0 0.0
    %360 = vmatprep.subr.mxu0 0.0
    %361 = vmatpush1.msra.mxu0 0.0
    %362 = vmatprep.subr.mxu0 0.0
    %363 = vmatpush1.msra.mxu0 0.0
    %364 = vmatprep.subr.mxu0 0.0
    %365 = vmatpush1.msra.mxu0 0.0
    %366 = vmatprep.subr.mxu0 0.0
    %367 = vmatpush1.msra.mxu0 0.0
    %368 = vmatprep.subr.mxu0 0.0
    %369 = vmatpush1.msra.mxu0 0.0
    %370 = vmatprep.subr.mxu0 0.0
    %371 = vmatpush1.msra.mxu0 0.0
    %372 = vmatprep.subr.mxu0 0.0
    %373 = vmatpush1.msra.mxu0 0.0
    %374 = vmatprep.subr.mxu0 0.0
    %375 = vmatpush1.msra.mxu0 0.0
    %376 = vmatprep.subr.mxu0 0.0
    %377 = vmatpush1.msra.mxu0 0.0
    %378 = vmatprep.subr.mxu0 0.0
    %379 = vmatpush1.msra.mxu0 0.0
    %380 = vmatprep.subr.mxu0 0.0
    %381 = vmatpush1.msra.mxu0 0.0
    %382 = vmatprep.subr.mxu0 0.0
    %383 = vmatpush1.msra.mxu0 0.0
    %384 = vmatprep.subr.mxu0 0.0
    %385 = vmatpush1.msra.mxu0 0.0
    %386 = vmatprep.subr.mxu0 0.0
    %387 = vmatpush1.msra.mxu0 0.0
    %388 = vmatprep.subr.mxu0 0.0
    %389 = vmatpush1.msra.mxu0 0.0
    %390 = vmatprep.subr.mxu0 0.0
    %391 = vmatpush1.msra.mxu0 0.0
    %392 = vmatprep.subr.mxu0 0.0
    %393 = vmatpush1.msra.mxu0 0.0
    %394 = vmatprep.subr.mxu0 0.0
    %395 = vmatpush1.msra.mxu0 0.0
    %396 = vmatprep.subr.mxu0 0.0
    %397 = vmatpush1.msra.mxu0 0.0
    %398 = vmatprep.subr.mxu0 0.0
    %399 = vmatpush1.msra.mxu0 0.0
    %400 = vmatprep.subr.mxu0 0.0
    %401 = vmatpush1.msra.mxu0 0.0
    %402 = vmatprep.mubr.f32.mxu0 0.0
    %403 = vmatmul.mubr.f32.gmra.mrb[0].mxu0 %v333
    %v404 = vpop.f32.mrb[0].mxu0
    %v405 = vadd.f32 0.0, %v404
    %v406 = vpop.f32.mrb[0].mxu0
    %407 = vmatprep.mubr.f32.mxu0 0.0
    %408 = vmatmul.mubr.f32.gmra.mrb[0].mxu0 %v336
    %v409 = vpop.f32.mrb[0].mxu0
    %v410 = vadd.f32 0.0, %v409
    %v411 = vpop.f32.mrb[0].mxu0
    %412 = vdwg.mxu0
    %413 = vrot.lane.b32.xlu0 %v207, 120
    %v414 = vpop.permute.xlu0 %413
    %415 = vrot.lane.b32.xlu0 %v208, 120
    %v416 = vpop.permute.xlu0 %415
    %417 = vrot.lane.b32.xlu0 %v156, 88
    %v418 = vpop.permute.xlu0 %417
    %419 = vrot.lane.b32.xlu0 %v161, 88
    %v420 = vpop.permute.xlu0 %419
    %v421 = vsel %vm215, %v414, 0
    %v423 = vsel %vm215, %v416, 0
    %v425 = vsel %vm215, %v418, 0
    %v427 = vsel %vm215, %v420, 0
    %429 = vmatprep.subr.mxu0 0.0
    %430 = vmatpush1.xpose.msra.mxu0 %v425
    %431 = vmatprep.subr.mxu0 0.0
    %432 = vmatpush1.xpose.msra.mxu0 %v427
    %433 = vmatprep.subr.mxu0 0.0
    %434 = vmatpush1.xpose.msra.mxu0 0.0
    %435 = vmatprep.subr.mxu0 0.0
    %436 = vmatpush1.xpose.msra.mxu0 0.0
    %437 = vmatprep.subr.mxu0 0.0
    %438 = vmatpush1.xpose.msra.mxu0 0.0
    %439 = vmatprep.subr.mxu0 0.0
    %440 = vmatpush1.xpose.msra.mxu0 0.0
    %441 = vmatprep.subr.mxu0 0.0
    %442 = vmatpush1.xpose.msra.mxu0 0.0
    %443 = vmatprep.subr.mxu0 0.0
    %444 = vmatpush1.xpose.msra.mxu0 0.0
    %445 = vmatprep.subr.mxu0 0.0
    %446 = vmatpush1.xpose.msra.mxu0 0.0
    %447 = vmatprep.subr.mxu0 0.0
    %448 = vmatpush1.xpose.msra.mxu0 0.0
    %449 = vmatprep.subr.mxu0 0.0
    %450 = vmatpush1.xpose.msra.mxu0 0.0
    %451 = vmatprep.subr.mxu0 0.0
    %452 = vmatpush1.xpose.msra.mxu0 0.0
    %453 = vmatprep.subr.mxu0 0.0
    %454 = vmatpush1.xpose.msra.mxu0 0.0
    %455 = vmatprep.subr.mxu0 0.0
    %456 = vmatpush1.xpose.msra.mxu0 0.0
    %457 = vmatprep.subr.mxu0 0.0
    %458 = vmatpush1.xpose.msra.mxu0 0.0
    %459 = vmatprep.subr.mxu0 0.0
    %460 = vmatpush1.xpose.msra.mxu0 0.0
    %461 = vmatprep.subr.mxu0 0.0
    %462 = vmatpush1.xpose.msra.mxu0 0.0
    %463 = vmatprep.subr.mxu0 0.0
    %464 = vmatpush1.xpose.msra.mxu0 0.0
    %465 = vmatprep.subr.mxu0 0.0
    %466 = vmatpush1.xpose.msra.mxu0 0.0
    %467 = vmatprep.subr.mxu0 0.0
    %468 = vmatpush1.xpose.msra.mxu0 0.0
    %469 = vmatprep.subr.mxu0 0.0
    %470 = vmatpush1.xpose.msra.mxu0 0.0
    %471 = vmatprep.subr.mxu0 0.0
    %472 = vmatpush1.xpose.msra.mxu0 0.0
    %473 = vmatprep.subr.mxu0 0.0
    %474 = vmatpush1.xpose.msra.mxu0 0.0
    %475 = vmatprep.subr.mxu0 0.0
    %476 = vmatpush1.xpose.msra.mxu0 0.0
    %477 = vmatprep.subr.mxu0 0.0
    %478 = vmatpush1.xpose.msra.mxu0 0.0
    %479 = vmatprep.subr.mxu0 0.0
    %480 = vmatpush1.xpose.msra.mxu0 0.0
    %481 = vmatprep.subr.mxu0 0.0
    %482 = vmatpush1.xpose.msra.mxu0 0.0
    %483 = vmatprep.subr.mxu0 0.0
    %484 = vmatpush1.xpose.msra.mxu0 0.0
    %485 = vmatprep.subr.mxu0 0.0
    %486 = vmatpush1.xpose.msra.mxu0 0.0
    %487 = vmatprep.subr.mxu0 0.0
    %488 = vmatpush1.xpose.msra.mxu0 0.0
    %489 = vmatprep.subr.mxu0 0.0
    %490 = vmatpush1.xpose.msra.mxu0 0.0
    %491 = vmatprep.subr.mxu0 0.0
    %492 = vmatpush1.xpose.msra.mxu0 0.0
    %493 = vmatprep.mubr.f32.mxu0 0.0
    %494 = vmatmul.mubr.f32.gmra.mrb[0].mxu0 %v421
    %v495 = vpop.f32.mrb[0].mxu0
    %v496 = vadd.f32 0.0, %v495
    %v497 = vpop.f32.mrb[0].mxu0
    %498 = vmatprep.mubr.f32.mxu0 0.0
    %499 = vmatmul.mubr.f32.gmra.mrb[0].mxu0 %v423
    %v500 = vpop.f32.mrb[0].mxu0
    %v501 = vadd.f32 0.0, %v500
    %v502 = vpop.f32.mrb[0].mxu0
    %503 = vdwg.mxu0
    %v504 = vsel %vm205, %v496, -1e+30
    %v505 = vsel %vm206, %v501, -1e+30
    %v506 = vsel %vm303, %v504, -inf
    %507 = vmax.xlane.f32.xlu0 %v506
    %v508 = vpop.xlane.xlu0 %507
    %v509 = vsel %vm303, %v505, -inf
    %510 = vmax.xlane.f32.xlu0 %v509
    %v511 = vpop.xlane.xlu0 %510
    %v512 = vsub.f32 %v504, %v508
    %v513 = vsub.f32 %v505, %v511
    %v514 = vmul.f32 %v512, 1.442695
    %v515 = vpow.pop %v514
    %v516 = vmul.f32 %v513, 1.442695
    %v517 = vpow.pop %v516
    %v518 = vsel %vm303, %v515, 0.0
    %519 = vadd.xlane.f32.xlu0 %v518
    %v520 = vpop.xlane.xlu0 %519
    %v521 = vsel %vm303, %v517, 0.0
    %522 = vadd.xlane.f32.xlu0 %v521
    %v523 = vpop.xlane.xlu0 %522
    %v524 = vrcp.pop %v520
    %v525 = vmul.f32 %v515, %v524
    %v526 = vrcp.pop %v523
    %v527 = vmul.f32 %v517, %v526
    %528 = vrot.lane.b32.xlu0 %v156, 56
    %v529 = vpop.permute.xlu0 %528
    %530 = vrot.lane.b32.xlu0 %v161, 56
    %v531 = vpop.permute.xlu0 %530
    %v535 = vsel %vm303, %v525, 0
    %v538 = vsel %vm303, %v527, 0
    %540 = vmatprep.subr.mxu0 0.0
    %541 = vmatpush1.msra.mxu0 %v529
    %542 = vmatprep.subr.mxu0 0.0
    %543 = vmatpush1.msra.mxu0 %v531
    %544 = vmatprep.subr.mxu0 0.0
    %545 = vmatpush1.msra.mxu0 0.0
    %546 = vmatprep.subr.mxu0 0.0
    %547 = vmatpush1.msra.mxu0 0.0
    %548 = vmatprep.subr.mxu0 0.0
    %549 = vmatpush1.msra.mxu0 0.0
    %550 = vmatprep.subr.mxu0 0.0
    %551 = vmatpush1.msra.mxu0 0.0
    %552 = vmatprep.subr.mxu0 0.0
    %553 = vmatpush1.msra.mxu0 0.0
    %554 = vmatprep.subr.mxu0 0.0
    %555 = vmatpush1.msra.mxu0 0.0
    %556 = vmatprep.subr.mxu0 0.0
    %557 = vmatpush1.msra.mxu0 0.0
    %558 = vmatprep.subr.mxu0 0.0
    %559 = vmatpush1.msra.mxu0 0.0
    %560 = vmatprep.subr.mxu0 0.0
    %561 = vmatpush1.msra.mxu0 0.0
    %562 = vmatprep.subr.mxu0 0.0
    %563 = vmatpush1.msra.mxu0 0.0
    %564 = vmatprep.subr.mxu0 0.0
    %565 = vmatpush1.msra.mxu0 0.0
    %566 = vmatprep.subr.mxu0 0.0
    %567 = vmatpush1.msra.mxu0 0.0
    %568 = vmatprep.subr.mxu0 0.0
    %569 = vmatpush1.msra.mxu0 0.0
    %570 = vmatprep.subr.mxu0 0.0
    %571 = vmatpush1.msra.mxu0 0.0
    %572 = vmatprep.subr.mxu0 0.0
    %573 = vmatpush1.msra.mxu0 0.0
    %574 = vmatprep.subr.mxu0 0.0
    %575 = vmatpush1.msra.mxu0 0.0
    %576 = vmatprep.subr.mxu0 0.0
    %577 = vmatpush1.msra.mxu0 0.0
    %578 = vmatprep.subr.mxu0 0.0
    %579 = vmatpush1.msra.mxu0 0.0
    %580 = vmatprep.subr.mxu0 0.0
    %581 = vmatpush1.msra.mxu0 0.0
    %582 = vmatprep.subr.mxu0 0.0
    %583 = vmatpush1.msra.mxu0 0.0
    %584 = vmatprep.subr.mxu0 0.0
    %585 = vmatpush1.msra.mxu0 0.0
    %586 = vmatprep.subr.mxu0 0.0
    %587 = vmatpush1.msra.mxu0 0.0
    %588 = vmatprep.subr.mxu0 0.0
    %589 = vmatpush1.msra.mxu0 0.0
    %590 = vmatprep.subr.mxu0 0.0
    %591 = vmatpush1.msra.mxu0 0.0
    %592 = vmatprep.subr.mxu0 0.0
    %593 = vmatpush1.msra.mxu0 0.0
    %594 = vmatprep.subr.mxu0 0.0
    %595 = vmatpush1.msra.mxu0 0.0
    %596 = vmatprep.subr.mxu0 0.0
    %597 = vmatpush1.msra.mxu0 0.0
    %598 = vmatprep.subr.mxu0 0.0
    %599 = vmatpush1.msra.mxu0 0.0
    %600 = vmatprep.subr.mxu0 0.0
    %601 = vmatpush1.msra.mxu0 0.0
    %602 = vmatprep.subr.mxu0 0.0
    %603 = vmatpush1.msra.mxu0 0.0
    %604 = vmatprep.mubr.f32.mxu0 0.0
    %605 = vmatmul.mubr.f32.gmra.mrb[0].mxu0 %v535
    %v606 = vpop.f32.mrb[0].mxu0
    %v607 = vadd.f32 0.0, %v606
    %v608 = vpop.f32.mrb[0].mxu0
    %609 = vmatprep.mubr.f32.mxu0 0.0
    %610 = vmatmul.mubr.f32.gmra.mrb[0].mxu0 %v538
    %v611 = vpop.f32.mrb[0].mxu0
    %v612 = vadd.f32 0.0, %v611
    %v613 = vpop.f32.mrb[0].mxu0
    %614 = vdwg.mxu0
    %619 = vrot.lane.b32.xlu0 %v23, 120
    %v620 = vpop.permute.xlu0 %619
    %621 = vrot.lane.b32.xlu0 %v24, 120
    %v622 = vpop.permute.xlu0 %621
    %623 = vrot.lane.b32.xlu0 %v25, 120
    %v624 = vpop.permute.xlu0 %623
    %625 = vrot.lane.b32.xlu0 %v26, 120
    %v626 = vpop.permute.xlu0 %625
    %v628 = vsel %vm215, %v607, 0
    %v631 = vsel %vm215, %v612, 0
    %v633 = vsel %vm215, %v620, 0
    %v635 = vsel %vm215, %v622, 0
    %v637 = vsel %vm215, %v624, 0
    %v639 = vsel %vm215, %v626, 0
    %641 = vmatprep.subr.mxu0 0.0
    %642 = vmatpush1.xpose.msra.mxu0 %v633
    %643 = vmatprep.subr.mxu0 0.0
    %644 = vmatpush1.xpose.msra.mxu0 %v635
    %645 = vmatprep.subr.mxu0 0.0
    %646 = vmatpush1.xpose.msra.mxu0 %v637
    %647 = vmatprep.subr.mxu0 0.0
    %648 = vmatpush1.xpose.msra.mxu0 %v639
    %649 = vmatprep.subr.mxu0 0.0
    %650 = vmatpush1.xpose.msra.mxu0 0.0
    %651 = vmatprep.subr.mxu0 0.0
    %652 = vmatpush1.xpose.msra.mxu0 0.0
    %653 = vmatprep.subr.mxu0 0.0
    %654 = vmatpush1.xpose.msra.mxu0 0.0
    %655 = vmatprep.subr.mxu0 0.0
    %656 = vmatpush1.xpose.msra.mxu0 0.0
    %657 = vmatprep.subr.mxu0 0.0
    %658 = vmatpush1.xpose.msra.mxu0 0.0
    %659 = vmatprep.subr.mxu0 0.0
    %660 = vmatpush1.xpose.msra.mxu0 0.0
    %661 = vmatprep.subr.mxu0 0.0
    %662 = vmatpush1.xpose.msra.mxu0 0.0
    %663 = vmatprep.subr.mxu0 0.0
    %664 = vmatpush1.xpose.msra.mxu0 0.0
    %665 = vmatprep.subr.mxu0 0.0
    %666 = vmatpush1.xpose.msra.mxu0 0.0
    %667 = vmatprep.subr.mxu0 0.0
    %668 = vmatpush1.xpose.msra.mxu0 0.0
    %669 = vmatprep.subr.mxu0 0.0
    %670 = vmatpush1.xpose.msra.mxu0 0.0
    %671 = vmatprep.subr.mxu0 0.0
    %672 = vmatpush1.xpose.msra.mxu0 0.0
    %673 = vmatprep.subr.mxu0 0.0
    %674 = vmatpush1.xpose.msra.mxu0 0.0
    %675 = vmatprep.subr.mxu0 0.0
    %676 = vmatpush1.xpose.msra.mxu0 0.0
    %677 = vmatprep.subr.mxu0 0.0
    %678 = vmatpush1.xpose.msra.mxu0 0.0
    %679 = vmatprep.subr.mxu0 0.0
    %680 = vmatpush1.xpose.msra.mxu0 0.0
    %681 = vmatprep.subr.mxu0 0.0
    %682 = vmatpush1.xpose.msra.mxu0 0.0
    %683 = vmatprep.subr.mxu0 0.0
    %684 = vmatpush1.xpose.msra.mxu0 0.0
    %685 = vmatprep.subr.mxu0 0.0
    %686 = vmatpush1.xpose.msra.mxu0 0.0
    %687 = vmatprep.subr.mxu0 0.0
    %688 = vmatpush1.xpose.msra.mxu0 0.0
    %689 = vmatprep.subr.mxu0 0.0
    %690 = vmatpush1.xpose.msra.mxu0 0.0
    %691 = vmatprep.subr.mxu0 0.0
    %692 = vmatpush1.xpose.msra.mxu0 0.0
    %693 = vmatprep.subr.mxu0 0.0
    %694 = vmatpush1.xpose.msra.mxu0 0.0
    %695 = vmatprep.subr.mxu0 0.0
    %696 = vmatpush1.xpose.msra.mxu0 0.0
    %697 = vmatprep.subr.mxu0 0.0
    %698 = vmatpush1.xpose.msra.mxu0 0.0
    %699 = vmatprep.subr.mxu0 0.0
    %700 = vmatpush1.xpose.msra.mxu0 0.0
    %701 = vmatprep.subr.mxu0 0.0
    %702 = vmatpush1.xpose.msra.mxu0 0.0
    %703 = vmatprep.subr.mxu0 0.0
    %704 = vmatpush1.xpose.msra.mxu0 0.0
    %705 = vmatprep.mubr.f32.mxu0 0.0
    %706 = vmatmul.mubr.f32.gmra.mrb[0].mxu0 %v628
    %v707 = vpop.f32.mrb[0].mxu0
    %v708 = vadd.f32 0.0, %v707
    %v709 = vpop.f32.mrb[0].mxu0
    %710 = vmatprep.mubr.f32.mxu0 0.0
    %711 = vmatmul.mubr.f32.gmra.mrb[0].mxu0 %v631
    %v712 = vpop.f32.mrb[0].mxu0
    %v713 = vadd.f32 0.0, %v712
    %v714 = vpop.f32.mrb[0].mxu0
    %715 = vdwg.mxu0
    %v717 = vsel %vm215, %v405, 0
    %v720 = vsel %vm215, %v410, 0
    %v722 = vsel %vm215, %v23, 0
    %v724 = vsel %vm215, %v24, 0
    %v726 = vsel %vm215, %v25, 0
    %v728 = vsel %vm215, %v26, 0
    %730 = vmatprep.subr.mxu0 0.0
    %731 = vmatpush1.xpose.msra.mxu0 %v722
    %732 = vmatprep.subr.mxu0 0.0
    %733 = vmatpush1.xpose.msra.mxu0 %v724
    %734 = vmatprep.subr.mxu0 0.0
    %735 = vmatpush1.xpose.msra.mxu0 %v726
    %736 = vmatprep.subr.mxu0 0.0
    %737 = vmatpush1.xpose.msra.mxu0 %v728
    %738 = vmatprep.subr.mxu0 0.0
    %739 = vmatpush1.xpose.msra.mxu0 0.0
    %740 = vmatprep.subr.mxu0 0.0
    %741 = vmatpush1.xpose.msra.mxu0 0.0
    %742 = vmatprep.subr.mxu0 0.0
    %743 = vmatpush1.xpose.msra.mxu0 0.0
    %744 = vmatprep.subr.mxu0 0.0
    %745 = vmatpush1.xpose.msra.mxu0 0.0
    %746 = vmatprep.subr.mxu0 0.0
    %747 = vmatpush1.xpose.msra.mxu0 0.0
    %748 = vmatprep.subr.mxu0 0.0
    %749 = vmatpush1.xpose.msra.mxu0 0.0
    %750 = vmatprep.subr.mxu0 0.0
    %751 = vmatpush1.xpose.msra.mxu0 0.0
    %752 = vmatprep.subr.mxu0 0.0
    %753 = vmatpush1.xpose.msra.mxu0 0.0
    %754 = vmatprep.subr.mxu0 0.0
    %755 = vmatpush1.xpose.msra.mxu0 0.0
    %756 = vmatprep.subr.mxu0 0.0
    %757 = vmatpush1.xpose.msra.mxu0 0.0
    %758 = vmatprep.subr.mxu0 0.0
    %759 = vmatpush1.xpose.msra.mxu0 0.0
    %760 = vmatprep.subr.mxu0 0.0
    %761 = vmatpush1.xpose.msra.mxu0 0.0
    %762 = vmatprep.subr.mxu0 0.0
    %763 = vmatpush1.xpose.msra.mxu0 0.0
    %764 = vmatprep.subr.mxu0 0.0
    %765 = vmatpush1.xpose.msra.mxu0 0.0
    %766 = vmatprep.subr.mxu0 0.0
    %767 = vmatpush1.xpose.msra.mxu0 0.0
    %768 = vmatprep.subr.mxu0 0.0
    %769 = vmatpush1.xpose.msra.mxu0 0.0
    %770 = vmatprep.subr.mxu0 0.0
    %771 = vmatpush1.xpose.msra.mxu0 0.0
    %772 = vmatprep.subr.mxu0 0.0
    %773 = vmatpush1.xpose.msra.mxu0 0.0
    %774 = vmatprep.subr.mxu0 0.0
    %775 = vmatpush1.xpose.msra.mxu0 0.0
    %776 = vmatprep.subr.mxu0 0.0
    %777 = vmatpush1.xpose.msra.mxu0 0.0
    %778 = vmatprep.subr.mxu0 0.0
    %779 = vmatpush1.xpose.msra.mxu0 0.0
    %780 = vmatprep.subr.mxu0 0.0
    %781 = vmatpush1.xpose.msra.mxu0 0.0
    %782 = vmatprep.subr.mxu0 0.0
    %783 = vmatpush1.xpose.msra.mxu0 0.0
    %784 = vmatprep.subr.mxu0 0.0
    %785 = vmatpush1.xpose.msra.mxu0 0.0
    %786 = vmatprep.subr.mxu0 0.0
    %787 = vmatpush1.xpose.msra.mxu0 0.0
    %788 = vmatprep.subr.mxu0 0.0
    %789 = vmatpush1.xpose.msra.mxu0 0.0
    %790 = vmatprep.subr.mxu0 0.0
    %791 = vmatpush1.xpose.msra.mxu0 0.0
    %792 = vmatprep.subr.mxu0 0.0
    %793 = vmatpush1.xpose.msra.mxu0 0.0
    %794 = vmatprep.mubr.f32.mxu0 0.0
    %795 = vmatmul.mubr.f32.gmra.mrb[0].mxu0 %v717
    %v796 = vpop.f32.mrb[0].mxu0
    %v797 = vadd.f32 %v708, %v796
    %v798 = vpop.f32.mrb[0].mxu0
    %799 = vmatprep.mubr.f32.mxu0 0.0
    %800 = vmatmul.mubr.f32.gmra.mrb[0].mxu0 %v720
    %v801 = vpop.f32.mrb[0].mxu0
    %v802 = vadd.f32 %v713, %v801
    %v803 = vpop.f32.mrb[0].mxu0
    %804 = vdwg.mxu0
    %805 = vrot.lane.b32.xlu0 %v207, 112
    %v806 = vpop.permute.xlu0 %805
    %807 = vrot.lane.b32.xlu0 %v208, 112
    %v808 = vpop.permute.xlu0 %807
    %809 = vrot.lane.b32.xlu0 %v156, 80
    %v810 = vpop.permute.xlu0 %809
    %811 = vrot.lane.b32.xlu0 %v161, 80
    %v812 = vpop.permute.xlu0 %811
    %v813 = vsel %vm215, %v806, 0
    %v815 = vsel %vm215, %v808, 0
    %v817 = vsel %vm215, %v810, 0
    %v819 = vsel %vm215, %v812, 0
    %821 = vmatprep.subr.mxu0 0.0
    %822 = vmatpush1.xpose.msra.mxu0 %v817
    %823 = vmatprep.subr.mxu0 0.0
    %824 = vmatpush1.xpose.msra.mxu0 %v819
    %825 = vmatprep.subr.mxu0 0.0
    %826 = vmatpush1.xpose.msra.mxu0 0.0
    %827 = vmatprep.subr.mxu0 0.0
    %828 = vmatpush1.xpose.msra.mxu0 0.0
    %829 = vmatprep.subr.mxu0 0.0
    %830 = vmatpush1.xpose.msra.mxu0 0.0
    %831 = vmatprep.subr.mxu0 0.0
    %832 = vmatpush1.xpose.msra.mxu0 0.0
    %833 = vmatprep.subr.mxu0 0.0
    %834 = vmatpush1.xpose.msra.mxu0 0.0
    %835 = vmatprep.subr.mxu0 0.0
    %836 = vmatpush1.xpose.msra.mxu0 0.0
    %837 = vmatprep.subr.mxu0 0.0
    %838 = vmatpush1.xpose.msra.mxu0 0.0
    %839 = vmatprep.subr.mxu0 0.0
    %840 = vmatpush1.xpose.msra.mxu0 0.0
    %841 = vmatprep.subr.mxu0 0.0
    %842 = vmatpush1.xpose.msra.mxu0 0.0
    %843 = vmatprep.subr.mxu0 0.0
    %844 = vmatpush1.xpose.msra.mxu0 0.0
    %845 = vmatprep.subr.mxu0 0.0
    %846 = vmatpush1.xpose.msra.mxu0 0.0
    %847 = vmatprep.subr.mxu0 0.0
    %848 = vmatpush1.xpose.msra.mxu0 0.0
    %849 = vmatprep.subr.mxu0 0.0
    %850 = vmatpush1.xpose.msra.mxu0 0.0
    %851 = vmatprep.subr.mxu0 0.0
    %852 = vmatpush1.xpose.msra.mxu0 0.0
    %853 = vmatprep.subr.mxu0 0.0
    %854 = vmatpush1.xpose.msra.mxu0 0.0
    %855 = vmatprep.subr.mxu0 0.0
    %856 = vmatpush1.xpose.msra.mxu0 0.0
    %857 = vmatprep.subr.mxu0 0.0
    %858 = vmatpush1.xpose.msra.mxu0 0.0
    %859 = vmatprep.subr.mxu0 0.0
    %860 = vmatpush1.xpose.msra.mxu0 0.0
    %861 = vmatprep.subr.mxu0 0.0
    %862 = vmatpush1.xpose.msra.mxu0 0.0
    %863 = vmatprep.subr.mxu0 0.0
    %864 = vmatpush1.xpose.msra.mxu0 0.0
    %865 = vmatprep.subr.mxu0 0.0
    %866 = vmatpush1.xpose.msra.mxu0 0.0
    %867 = vmatprep.subr.mxu0 0.0
    %868 = vmatpush1.xpose.msra.mxu0 0.0
    %869 = vmatprep.subr.mxu0 0.0
    %870 = vmatpush1.xpose.msra.mxu0 0.0
    %871 = vmatprep.subr.mxu0 0.0
    %872 = vmatpush1.xpose.msra.mxu0 0.0
    %873 = vmatprep.subr.mxu0 0.0
    %874 = vmatpush1.xpose.msra.mxu0 0.0
    %875 = vmatprep.subr.mxu0 0.0
    %876 = vmatpush1.xpose.msra.mxu0 0.0
    %877 = vmatprep.subr.mxu0 0.0
    %878 = vmatpush1.xpose.msra.mxu0 0.0
    %879 = vmatprep.subr.mxu0 0.0
    %880 = vmatpush1.xpose.msra.mxu0 0.0
    %881 = vmatprep.subr.mxu0 0.0
    %882 = vmatpush1.xpose.msra.mxu0 0.0
    %883 = vmatprep.subr.mxu0 0.0
    %884 = vmatpush1.xpose.msra.mxu0 0.0
    %885 = vmatprep.mubr.f32.mxu0 0.0
    %886 = vmatmul.mubr.f32.gmra.mrb[0].mxu0 %v813
    %v887 = vpop.f32.mrb[0].mxu0
    %v888 = vadd.f32 0.0, %v887
    %v889 = vpop.f32.mrb[0].mxu0
    %890 = vmatprep.mubr.f32.mxu0 0.0
    %891 = vmatmul.mubr.f32.gmra.mrb[0].mxu0 %v815
    %v892 = vpop.f32.mrb[0].mxu0
    %v893 = vadd.f32 0.0, %v892
    %v894 = vpop.f32.mrb[0].mxu0
    %895 = vdwg.mxu0
    %v896 = vsel %vm205, %v888, -1e+30
    %v897 = vsel %vm206, %v893, -1e+30
    %v898 = vsel %vm303, %v896, -inf
    %899 = vmax.xlane.f32.xlu0 %v898
    %v900 = vpop.xlane.xlu0 %899
    %v901 = vsel %vm303, %v897, -inf
    %902 = vmax.xlane.f32.xlu0 %v901
    %v903 = vpop.xlane.xlu0 %902
    %v904 = vsub.f32 %v896, %v900
    %v905 = vsub.f32 %v897, %v903
    %v906 = vmul.f32 %v904, 1.442695
    %v907 = vpow.pop %v906
    %v908 = vmul.f32 %v905, 1.442695
    %v909 = vpow.pop %v908
    %v910 = vsel %vm303, %v907, 0.0
    %911 = vadd.xlane.f32.xlu0 %v910
    %v912 = vpop.xlane.xlu0 %911
    %v913 = vsel %vm303, %v909, 0.0
    %914 = vadd.xlane.f32.xlu0 %v913
    %v915 = vpop.xlane.xlu0 %914
    %v916 = vrcp.pop %v912
    %v917 = vmul.f32 %v907, %v916
    %v918 = vrcp.pop %v915
    %v919 = vmul.f32 %v909, %v918
    %920 = vrot.lane.b32.xlu0 %v156, 48
    %v921 = vpop.permute.xlu0 %920
    %922 = vrot.lane.b32.xlu0 %v161, 48
    %v923 = vpop.permute.xlu0 %922
    %v927 = vsel %vm303, %v917, 0
    %v930 = vsel %vm303, %v919, 0
    %932 = vmatprep.subr.mxu0 0.0
    %933 = vmatpush1.msra.mxu0 %v921
    %934 = vmatprep.subr.mxu0 0.0
    %935 = vmatpush1.msra.mxu0 %v923
    %936 = vmatprep.subr.mxu0 0.0
    %937 = vmatpush1.msra.mxu0 0.0
    %938 = vmatprep.subr.mxu0 0.0
    %939 = vmatpush1.msra.mxu0 0.0
    %940 = vmatprep.subr.mxu0 0.0
    %941 = vmatpush1.msra.mxu0 0.0
    %942 = vmatprep.subr.mxu0 0.0
    %943 = vmatpush1.msra.mxu0 0.0
    %944 = vmatprep.subr.mxu0 0.0
    %945 = vmatpush1.msra.mxu0 0.0
    %946 = vmatprep.subr.mxu0 0.0
    %947 = vmatpush1.msra.mxu0 0.0
    %948 = vmatprep.subr.mxu0 0.0
    %949 = vmatpush1.msra.mxu0 0.0
    %950 = vmatprep.subr.mxu0 0.0
    %951 = vmatpush1.msra.mxu0 0.0
    %952 = vmatprep.subr.mxu0 0.0
    %953 = vmatpush1.msra.mxu0 0.0
    %954 = vmatprep.subr.mxu0 0.0
    %955 = vmatpush1.msra.mxu0 0.0
    %956 = vmatprep.subr.mxu0 0.0
    %957 = vmatpush1.msra.mxu0 0.0
    %958 = vmatprep.subr.mxu0 0.0
    %959 = vmatpush1.msra.mxu0 0.0
    %960 = vmatprep.subr.mxu0 0.0
    %961 = vmatpush1.msra.mxu0 0.0
    %962 = vmatprep.subr.mxu0 0.0
    %963 = vmatpush1.msra.mxu0 0.0
    %964 = vmatprep.subr.mxu0 0.0
    %965 = vmatpush1.msra.mxu0 0.0
    %966 = vmatprep.subr.mxu0 0.0
    %967 = vmatpush1.msra.mxu0 0.0
    %968 = vmatprep.subr.mxu0 0.0
    %969 = vmatpush1.msra.mxu0 0.0
    %970 = vmatprep.subr.mxu0 0.0
    %971 = vmatpush1.msra.mxu0 0.0
    %972 = vmatprep.subr.mxu0 0.0
    %973 = vmatpush1.msra.mxu0 0.0
    %974 = vmatprep.subr.mxu0 0.0
    %975 = vmatpush1.msra.mxu0 0.0
    %976 = vmatprep.subr.mxu0 0.0
    %977 = vmatpush1.msra.mxu0 0.0
    %978 = vmatprep.subr.mxu0 0.0
    %979 = vmatpush1.msra.mxu0 0.0
    %980 = vmatprep.subr.mxu0 0.0
    %981 = vmatpush1.msra.mxu0 0.0
    %982 = vmatprep.subr.mxu0 0.0
    %983 = vmatpush1.msra.mxu0 0.0
    %984 = vmatprep.subr.mxu0 0.0
    %985 = vmatpush1.msra.mxu0 0.0
    %986 = vmatprep.subr.mxu0 0.0
    %987 = vmatpush1.msra.mxu0 0.0
    %988 = vmatprep.subr.mxu0 0.0
    %989 = vmatpush1.msra.mxu0 0.0
    %990 = vmatprep.subr.mxu0 0.0
    %991 = vmatpush1.msra.mxu0 0.0
    %992 = vmatprep.subr.mxu0 0.0
    %993 = vmatpush1.msra.mxu0 0.0
    %994 = vmatprep.subr.mxu0 0.0
    %995 = vmatpush1.msra.mxu0 0.0
    %996 = vmatprep.mubr.f32.mxu0 0.0
    %997 = vmatmul.mubr.f32.gmra.mrb[0].mxu0 %v927
    %v998 = vpop.f32.mrb[0].mxu0
    %v999 = vadd.f32 0.0, %v998
    %v1000 = vpop.f32.mrb[0].mxu0
    %1001 = vmatprep.mubr.f32.mxu0 0.0
    %1002 = vmatmul.mubr.f32.gmra.mrb[0].mxu0 %v930
    %v1003 = vpop.f32.mrb[0].mxu0
    %v1004 = vadd.f32 0.0, %v1003
    %v1005 = vpop.f32.mrb[0].mxu0
    %1006 = vdwg.mxu0
    %1007 = vrot.lane.b32.xlu0 %v23, 112
    %v1008 = vpop.permute.xlu0 %1007
    %1009 = vrot.lane.b32.xlu0 %v24, 112
    %v1010 = vpop.permute.xlu0 %1009
    %1011 = vrot.lane.b32.xlu0 %v25, 112
    %v1012 = vpop.permute.xlu0 %1011
    %1013 = vrot.lane.b32.xlu0 %v26, 112
    %v1014 = vpop.permute.xlu0 %1013
    %v1016 = vsel %vm215, %v999, 0
    %v1019 = vsel %vm215, %v1004, 0
    %v1021 = vsel %vm215, %v1008, 0
    %v1023 = vsel %vm215, %v1010, 0
    %v1025 = vsel %vm215, %v1012, 0
    %v1027 = vsel %vm215, %v1014, 0
    %1029 = vmatprep.subr.mxu0 0.0
    %1030 = vmatpush1.xpose.msra.mxu0 %v1021
    %1031 = vmatprep.subr.mxu0 0.0
    %1032 = vmatpush1.xpose.msra.mxu0 %v1023
    %1033 = vmatprep.subr.mxu0 0.0
    %1034 = vmatpush1.xpose.msra.mxu0 %v1025
    %1035 = vmatprep.subr.mxu0 0.0
    %1036 = vmatpush1.xpose.msra.mxu0 %v1027
    %1037 = vmatprep.subr.mxu0 0.0
    %1038 = vmatpush1.xpose.msra.mxu0 0.0
    %1039 = vmatprep.subr.mxu0 0.0
    %1040 = vmatpush1.xpose.msra.mxu0 0.0
    %1041 = vmatprep.subr.mxu0 0.0
    %1042 = vmatpush1.xpose.msra.mxu0 0.0
    %1043 = vmatprep.subr.mxu0 0.0
    %1044 = vmatpush1.xpose.msra.mxu0 0.0
    %1045 = vmatprep.subr.mxu0 0.0
    %1046 = vmatpush1.xpose.msra.mxu0 0.0
    %1047 = vmatprep.subr.mxu0 0.0
    %1048 = vmatpush1.xpose.msra.mxu0 0.0
    %1049 = vmatprep.subr.mxu0 0.0
    %1050 = vmatpush1.xpose.msra.mxu0 0.0
    %1051 = vmatprep.subr.mxu0 0.0
    %1052 = vmatpush1.xpose.msra.mxu0 0.0
    %1053 = vmatprep.subr.mxu0 0.0
    %1054 = vmatpush1.xpose.msra.mxu0 0.0
    %1055 = vmatprep.subr.mxu0 0.0
    %1056 = vmatpush1.xpose.msra.mxu0 0.0
    %1057 = vmatprep.subr.mxu0 0.0
    %1058 = vmatpush1.xpose.msra.mxu0 0.0
    %1059 = vmatprep.subr.mxu0 0.0
    %1060 = vmatpush1.xpose.msra.mxu0 0.0
    %1061 = vmatprep.subr.mxu0 0.0
    %1062 = vmatpush1.xpose.msra.mxu0 0.0
    %1063 = vmatprep.subr.mxu0 0.0
    %1064 = vmatpush1.xpose.msra.mxu0 0.0
    %1065 = vmatprep.subr.mxu0 0.0
    %1066 = vmatpush1.xpose.msra.mxu0 0.0
    %1067 = vmatprep.subr.mxu0 0.0
    %1068 = vmatpush1.xpose.msra.mxu0 0.0
    %1069 = vmatprep.subr.mxu0 0.0
    %1070 = vmatpush1.xpose.msra.mxu0 0.0
    %1071 = vmatprep.subr.mxu0 0.0
    %1072 = vmatpush1.xpose.msra.mxu0 0.0
    %1073 = vmatprep.subr.mxu0 0.0
    %1074 = vmatpush1.xpose.msra.mxu0 0.0
    %1075 = vmatprep.subr.mxu0 0.0
    %1076 = vmatpush1.xpose.msra.mxu0 0.0
    %1077 = vmatprep.subr.mxu0 0.0
    %1078 = vmatpush1.xpose.msra.mxu0 0.0
    %1079 = vmatprep.subr.mxu0 0.0
    %1080 = vmatpush1.xpose.msra.mxu0 0.0
    %1081 = vmatprep.subr.mxu0 0.0
    %1082 = vmatpush1.xpose.msra.mxu0 0.0
    %1083 = vmatprep.subr.mxu0 0.0
    %1084 = vmatpush1.xpose.msra.mxu0 0.0
    %1085 = vmatprep.subr.mxu0 0.0
    %1086 = vmatpush1.xpose.msra.mxu0 0.0
    %1087 = vmatprep.subr.mxu0 0.0
    %1088 = vmatpush1.xpose.msra.mxu0 0.0
    %1089 = vmatprep.subr.mxu0 0.0
    %1090 = vmatpush1.xpose.msra.mxu0 0.0
    %1091 = vmatprep.subr.mxu0 0.0
    %1092 = vmatpush1.xpose.msra.mxu0 0.0
    %1093 = vmatprep.mubr.f32.mxu0 0.0
    %1094 = vmatmul.mubr.f32.gmra.mrb[0].mxu0 %v1016
    %v1095 = vpop.f32.mrb[0].mxu0
    %v1096 = vadd.f32 0.0, %v1095
    %v1097 = vpop.f32.mrb[0].mxu0
    %1098 = vmatprep.mubr.f32.mxu0 0.0
    %1099 = vmatmul.mubr.f32.gmra.mrb[0].mxu0 %v1019
    %v1100 = vpop.f32.mrb[0].mxu0
    %v1101 = vadd.f32 0.0, %v1100
    %v1102 = vpop.f32.mrb[0].mxu0
    %1103 = vdwg.mxu0
    %v1104 = vadd.f32 %v797, %v1096
    %v1105 = vadd.f32 %v802, %v1101
    %1106 = vrot.lane.b32.xlu0 %v207, 104
    %v1107 = vpop.permute.xlu0 %1106
    %1108 = vrot.lane.b32.xlu0 %v208, 104
    %v1109 = vpop.permute.xlu0 %1108
    %1110 = vrot.lane.b32.xlu0 %v156, 72
    %v1111 = vpop.permute.xlu0 %1110
    %1112 = vrot.lane.b32.xlu0 %v161, 72
    %v1113 = vpop.permute.xlu0 %1112
    %v1114 = vsel %vm215, %v1107, 0
    %v1116 = vsel %vm215, %v1109, 0
    %v1118 = vsel %vm215, %v1111, 0
    %v1120 = vsel %vm215, %v1113, 0
    %1122 = vmatprep.subr.mxu0 0.0
    %1123 = vmatpush1.xpose.msra.mxu0 %v1118
    %1124 = vmatprep.subr.mxu0 0.0
    %1125 = vmatpush1.xpose.msra.mxu0 %v1120
    %1126 = vmatprep.subr.mxu0 0.0
    %1127 = vmatpush1.xpose.msra.mxu0 0.0
    %1128 = vmatprep.subr.mxu0 0.0
    %1129 = vmatpush1.xpose.msra.mxu0 0.0
    %1130 = vmatprep.subr.mxu0 0.0
    %1131 = vmatpush1.xpose.msra.mxu0 0.0
    %1132 = vmatprep.subr.mxu0 0.0
    %1133 = vmatpush1.xpose.msra.mxu0 0.0
    %1134 = vmatprep.subr.mxu0 0.0
    %1135 = vmatpush1.xpose.msra.mxu0 0.0
    %1136 = vmatprep.subr.mxu0 0.0
    %1137 = vmatpush1.xpose.msra.mxu0 0.0
    %1138 = vmatprep.subr.mxu0 0.0
    %1139 = vmatpush1.xpose.msra.mxu0 0.0
    %1140 = vmatprep.subr.mxu0 0.0
    %1141 = vmatpush1.xpose.msra.mxu0 0.0
    %1142 = vmatprep.subr.mxu0 0.0
    %1143 = vmatpush1.xpose.msra.mxu0 0.0
    %1144 = vmatprep.subr.mxu0 0.0
    %1145 = vmatpush1.xpose.msra.mxu0 0.0
    %1146 = vmatprep.subr.mxu0 0.0
    %1147 = vmatpush1.xpose.msra.mxu0 0.0
    %1148 = vmatprep.subr.mxu0 0.0
    %1149 = vmatpush1.xpose.msra.mxu0 0.0
    %1150 = vmatprep.subr.mxu0 0.0
    %1151 = vmatpush1.xpose.msra.mxu0 0.0
    %1152 = vmatprep.subr.mxu0 0.0
    %1153 = vmatpush1.xpose.msra.mxu0 0.0
    %1154 = vmatprep.subr.mxu0 0.0
    %1155 = vmatpush1.xpose.msra.mxu0 0.0
    %1156 = vmatprep.subr.mxu0 0.0
    %1157 = vmatpush1.xpose.msra.mxu0 0.0
    %1158 = vmatprep.subr.mxu0 0.0
    %1159 = vmatpush1.xpose.msra.mxu0 0.0
    %1160 = vmatprep.subr.mxu0 0.0
    %1161 = vmatpush1.xpose.msra.mxu0 0.0
    %1162 = vmatprep.subr.mxu0 0.0
    %1163 = vmatpush1.xpose.msra.mxu0 0.0
    %1164 = vmatprep.subr.mxu0 0.0
    %1165 = vmatpush1.xpose.msra.mxu0 0.0
    %1166 = vmatprep.subr.mxu0 0.0
    %1167 = vmatpush1.xpose.msra.mxu0 0.0
    %1168 = vmatprep.subr.mxu0 0.0
    %1169 = vmatpush1.xpose.msra.mxu0 0.0
    %1170 = vmatprep.subr.mxu0 0.0
    %1171 = vmatpush1.xpose.msra.mxu0 0.0
    %1172 = vmatprep.subr.mxu0 0.0
    %1173 = vmatpush1.xpose.msra.mxu0 0.0
    %1174 = vmatprep.subr.mxu0 0.0
    %1175 = vmatpush1.xpose.msra.mxu0 0.0
    %1176 = vmatprep.subr.mxu0 0.0
    %1177 = vmatpush1.xpose.msra.mxu0 0.0
    %1178 = vmatprep.subr.mxu0 0.0
    %1179 = vmatpush1.xpose.msra.mxu0 0.0
    %1180 = vmatprep.subr.mxu0 0.0
    %1181 = vmatpush1.xpose.msra.mxu0 0.0
    %1182 = vmatprep.subr.mxu0 0.0
    %1183 = vmatpush1.xpose.msra.mxu0 0.0
    %1184 = vmatprep.subr.mxu0 0.0
    %1185 = vmatpush1.xpose.msra.mxu0 0.0
    %1186 = vmatprep.mubr.f32.mxu0 0.0
    %1187 = vmatmul.mubr.f32.gmra.mrb[0].mxu0 %v1114
    %v1188 = vpop.f32.mrb[0].mxu0
    %v1189 = vadd.f32 0.0, %v1188
    %v1190 = vpop.f32.mrb[0].mxu0
    %1191 = vmatprep.mubr.f32.mxu0 0.0
    %1192 = vmatmul.mubr.f32.gmra.mrb[0].mxu0 %v1116
    %v1193 = vpop.f32.mrb[0].mxu0
    %v1194 = vadd.f32 0.0, %v1193
    %v1195 = vpop.f32.mrb[0].mxu0
    %1196 = vdwg.mxu0
    %v1197 = vsel %vm205, %v1189, -1e+30
    %v1198 = vsel %vm206, %v1194, -1e+30
    %v1199 = vsel %vm303, %v1197, -inf
    %1200 = vmax.xlane.f32.xlu0 %v1199
    %v1201 = vpop.xlane.xlu0 %1200
    %v1202 = vsel %vm303, %v1198, -inf
    %1203 = vmax.xlane.f32.xlu0 %v1202
    %v1204 = vpop.xlane.xlu0 %1203
    %v1205 = vsub.f32 %v1197, %v1201
    %v1206 = vsub.f32 %v1198, %v1204
    %v1207 = vmul.f32 %v1205, 1.442695
    %v1208 = vpow.pop %v1207
    %v1209 = vmul.f32 %v1206, 1.442695
    %v1210 = vpow.pop %v1209
    %v1211 = vsel %vm303, %v1208, 0.0
    %1212 = vadd.xlane.f32.xlu0 %v1211
    %v1213 = vpop.xlane.xlu0 %1212
    %v1214 = vsel %vm303, %v1210, 0.0
    %1215 = vadd.xlane.f32.xlu0 %v1214
    %v1216 = vpop.xlane.xlu0 %1215
    %v1217 = vrcp.pop %v1213
    %v1218 = vmul.f32 %v1208, %v1217
    %v1219 = vrcp.pop %v1216
    %v1220 = vmul.f32 %v1210, %v1219
    %1221 = vrot.lane.b32.xlu0 %v156, 40
    %v1222 = vpop.permute.xlu0 %1221
    %1223 = vrot.lane.b32.xlu0 %v161, 40
    %v1224 = vpop.permute.xlu0 %1223
    %v1228 = vsel %vm303, %v1218, 0
    %v1231 = vsel %vm303, %v1220, 0
    %1233 = vmatprep.subr.mxu0 0.0
    %1234 = vmatpush1.msra.mxu0 %v1222
    %1235 = vmatprep.subr.mxu0 0.0
    %1236 = vmatpush1.msra.mxu0 %v1224
    %1237 = vmatprep.subr.mxu0 0.0
    %1238 = vmatpush1.msra.mxu0 0.0
    %1239 = vmatprep.subr.mxu0 0.0
    %1240 = vmatpush1.msra.mxu0 0.0
    %1241 = vmatprep.subr.mxu0 0.0
    %1242 = vmatpush1.msra.mxu0 0.0
    %1243 = vmatprep.subr.mxu0 0.0
    %1244 = vmatpush1.msra.mxu0 0.0
    %1245 = vmatprep.subr.mxu0 0.0
    %1246 = vmatpush1.msra.mxu0 0.0
    %1247 = vmatprep.subr.mxu0 0.0
    %1248 = vmatpush1.msra.mxu0 0.0
    %1249 = vmatprep.subr.mxu0 0.0
    %1250 = vmatpush1.msra.mxu0 0.0
    %1251 = vmatprep.subr.mxu0 0.0
    %1252 = vmatpush1.msra.mxu0 0.0
    %1253 = vmatprep.subr.mxu0 0.0
    %1254 = vmatpush1.msra.mxu0 0.0
    %1255 = vmatprep.subr.mxu0 0.0
    %1256 = vmatpush1.msra.mxu0 0.0
    %1257 = vmatprep.subr.mxu0 0.0
    %1258 = vmatpush1.msra.mxu0 0.0
    %1259 = vmatprep.subr.mxu0 0.0
    %1260 = vmatpush1.msra.mxu0 0.0
    %1261 = vmatprep.subr.mxu0 0.0
    %1262 = vmatpush1.msra.mxu0 0.0
    %1263 = vmatprep.subr.mxu0 0.0
    %1264 = vmatpush1.msra.mxu0 0.0
    %1265 = vmatprep.subr.mxu0 0.0
    %1266 = vmatpush1.msra.mxu0 0.0
    %1267 = vmatprep.subr.mxu0 0.0
    %1268 = vmatpush1.msra.mxu0 0.0
    %1269 = vmatprep.subr.mxu0 0.0
    %1270 = vmatpush1.msra.mxu0 0.0
    %1271 = vmatprep.subr.mxu0 0.0
    %1272 = vmatpush1.msra.mxu0 0.0
    %1273 = vmatprep.subr.mxu0 0.0
    %1274 = vmatpush1.msra.mxu0 0.0
    %1275 = vmatprep.subr.mxu0 0.0
    %1276 = vmatpush1.msra.mxu0 0.0
    %1277 = vmatprep.subr.mxu0 0.0
    %1278 = vmatpush1.msra.mxu0 0.0
    %1279 = vmatprep.subr.mxu0 0.0
    %1280 = vmatpush1.msra.mxu0 0.0
    %1281 = vmatprep.subr.mxu0 0.0
    %1282 = vmatpush1.msra.mxu0 0.0
    %1283 = vmatprep.subr.mxu0 0.0
    %1284 = vmatpush1.msra.mxu0 0.0
    %1285 = vmatprep.subr.mxu0 0.0
    %1286 = vmatpush1.msra.mxu0 0.0
    %1287 = vmatprep.subr.mxu0 0.0
    %1288 = vmatpush1.msra.mxu0 0.0
    %1289 = vmatprep.subr.mxu0 0.0
    %1290 = vmatpush1.msra.mxu0 0.0
    %1291 = vmatprep.subr.mxu0 0.0
    %1292 = vmatpush1.msra.mxu0 0.0
    %1293 = vmatprep.subr.mxu0 0.0
    %1294 = vmatpush1.msra.mxu0 0.0
    %1295 = vmatprep.subr.mxu0 0.0
    %1296 = vmatpush1.msra.mxu0 0.0
    %1297 = vmatprep.mubr.f32.mxu0 0.0
    %1298 = vmatmul.mubr.f32.gmra.mrb[0].mxu0 %v1228
    %v1299 = vpop.f32.mrb[0].mxu0
    %v1300 = vadd.f32 0.0, %v1299
    %v1301 = vpop.f32.mrb[0].mxu0
    %1302 = vmatprep.mubr.f32.mxu0 0.0
    %1303 = vmatmul.mubr.f32.gmra.mrb[0].mxu0 %v1231
    %v1304 = vpop.f32.mrb[0].mxu0
    %v1305 = vadd.f32 0.0, %v1304
    %v1306 = vpop.f32.mrb[0].mxu0
    %1307 = vdwg.mxu0
    %1308 = vrot.lane.b32.xlu0 %v23, 104
    %v1309 = vpop.permute.xlu0 %1308
    %1310 = vrot.lane.b32.xlu0 %v24, 104
    %v1311 = vpop.permute.xlu0 %1310
    %1312 = vrot.lane.b32.xlu0 %v25, 104
    %v1313 = vpop.permute.xlu0 %1312
    %1314 = vrot.lane.b32.xlu0 %v26, 104
    %v1315 = vpop.permute.xlu0 %1314
    %v1317 = vsel %vm215, %v1300, 0
    %v1320 = vsel %vm215, %v1305, 0
    %v1322 = vsel %vm215, %v1309, 0
    %v1324 = vsel %vm215, %v1311, 0
    %v1326 = vsel %vm215, %v1313, 0
    %v1328 = vsel %vm215, %v1315, 0
    %1330 = vmatprep.subr.mxu0 0.0
    %1331 = vmatpush1.xpose.msra.mxu0 %v1322
    %1332 = vmatprep.subr.mxu0 0.0
    %1333 = vmatpush1.xpose.msra.mxu0 %v1324
    %1334 = vmatprep.subr.mxu0 0.0
    %1335 = vmatpush1.xpose.msra.mxu0 %v1326
    %1336 = vmatprep.subr.mxu0 0.0
    %1337 = vmatpush1.xpose.msra.mxu0 %v1328
    %1338 = vmatprep.subr.mxu0 0.0
    %1339 = vmatpush1.xpose.msra.mxu0 0.0
    %1340 = vmatprep.subr.mxu0 0.0
    %1341 = vmatpush1.xpose.msra.mxu0 0.0
    %1342 = vmatprep.subr.mxu0 0.0
    %1343 = vmatpush1.xpose.msra.mxu0 0.0
    %1344 = vmatprep.subr.mxu0 0.0
    %1345 = vmatpush1.xpose.msra.mxu0 0.0
    %1346 = vmatprep.subr.mxu0 0.0
    %1347 = vmatpush1.xpose.msra.mxu0 0.0
    %1348 = vmatprep.subr.mxu0 0.0
    %1349 = vmatpush1.xpose.msra.mxu0 0.0
    %1350 = vmatprep.subr.mxu0 0.0
    %1351 = vmatpush1.xpose.msra.mxu0 0.0
    %1352 = vmatprep.subr.mxu0 0.0
    %1353 = vmatpush1.xpose.msra.mxu0 0.0
    %1354 = vmatprep.subr.mxu0 0.0
    %1355 = vmatpush1.xpose.msra.mxu0 0.0
    %1356 = vmatprep.subr.mxu0 0.0
    %1357 = vmatpush1.xpose.msra.mxu0 0.0
    %1358 = vmatprep.subr.mxu0 0.0
    %1359 = vmatpush1.xpose.msra.mxu0 0.0
    %1360 = vmatprep.subr.mxu0 0.0
    %1361 = vmatpush1.xpose.msra.mxu0 0.0
    %1362 = vmatprep.subr.mxu0 0.0
    %1363 = vmatpush1.xpose.msra.mxu0 0.0
    %1364 = vmatprep.subr.mxu0 0.0
    %1365 = vmatpush1.xpose.msra.mxu0 0.0
    %1366 = vmatprep.subr.mxu0 0.0
    %1367 = vmatpush1.xpose.msra.mxu0 0.0
    %1368 = vmatprep.subr.mxu0 0.0
    %1369 = vmatpush1.xpose.msra.mxu0 0.0
    %1370 = vmatprep.subr.mxu0 0.0
    %1371 = vmatpush1.xpose.msra.mxu0 0.0
    %1372 = vmatprep.subr.mxu0 0.0
    %1373 = vmatpush1.xpose.msra.mxu0 0.0
    %1374 = vmatprep.subr.mxu0 0.0
    %1375 = vmatpush1.xpose.msra.mxu0 0.0
    %1376 = vmatprep.subr.mxu0 0.0
    %1377 = vmatpush1.xpose.msra.mxu0 0.0
    %1378 = vmatprep.subr.mxu0 0.0
    %1379 = vmatpush1.xpose.msra.mxu0 0.0
    %1380 = vmatprep.subr.mxu0 0.0
    %1381 = vmatpush1.xpose.msra.mxu0 0.0
    %1382 = vmatprep.subr.mxu0 0.0
    %1383 = vmatpush1.xpose.msra.mxu0 0.0
    %1384 = vmatprep.subr.mxu0 0.0
    %1385 = vmatpush1.xpose.msra.mxu0 0.0
    %1386 = vmatprep.subr.mxu0 0.0
    %1387 = vmatpush1.xpose.msra.mxu0 0.0
    %1388 = vmatprep.subr.mxu0 0.0
    %1389 = vmatpush1.xpose.msra.mxu0 0.0
    %1390 = vmatprep.subr.mxu0 0.0
    %1391 = vmatpush1.xpose.msra.mxu0 0.0
    %1392 = vmatprep.subr.mxu0 0.0
    %1393 = vmatpush1.xpose.msra.mxu0 0.0
    %1394 = vmatprep.mubr.f32.mxu0 0.0
    %1395 = vmatmul.mubr.f32.gmra.mrb[0].mxu0 %v1317
    %v1396 = vpop.f32.mrb[0].mxu0
    %v1397 = vadd.f32 0.0, %v1396
    %v1398 = vpop.f32.mrb[0].mxu0
    %1399 = vmatprep.mubr.f32.mxu0 0.0
    %1400 = vmatmul.mubr.f32.gmra.mrb[0].mxu0 %v1320
    %v1401 = vpop.f32.mrb[0].mxu0
    %v1402 = vadd.f32 0.0, %v1401
    %v1403 = vpop.f32.mrb[0].mxu0
    %1404 = vdwg.mxu0
    %v1405 = vadd.f32 %v1104, %v1397
    %v1406 = vadd.f32 %v1105, %v1402
    %v1407 = vld [vmem:[%s4] sm:$0x1]
    %v1409 = vlaneseq
    %v1410 = vshrl.u32 %v1409, 7
    %v1411 = vsub.s32 0, %v1410
    %v1412 = vrot.slane %v1407, %v1411
    %v1414 = vadd.f32 %v1405, %v1412
    %v1415 = vadd.f32 %v1406, %v1412
    %v1416 = vxor.u32 %v1414, 2147483648
    %v1417 = vxor.u32 %v1415, 2147483648
    %v1418 = vmul.f32 %v1416, 1.442695
    %v1419 = vpow.pop %v1418
    %v1420 = vmul.f32 %v1417, 1.442695
    %v1421 = vpow.pop %v1420
    %v1422 = vadd.f32 %v1419, 1.0
    %v1423 = vadd.f32 %v1421, 1.0
    %v1424 = vrcp.pop %v1422
    %v1425 = vmul.f32 1.0, %v1424
    %v1426 = vrcp.pop %v1423
    %v1427 = vmul.f32 1.0, %v1426
    %1428 = vst.msk [vmem:[#allocation2] sm:$0xff] %vm46, %v1425
    %1429 = vst.msk [vmem:[#allocation2 + $0x8] sm:$0xff] %vm46, %v1427
    // Predicated region
    $region22: #{model_forward.1} parent=1 // pred_check
      _
    $region23: #{model_forward.1} parent=1 // pred_check_branch
      %1431 = sbr.rel (0) target = $region25
    $region24: #{model_forward.1} parent=1 // pred_region
      %s1433 = ssub.s32 256, 256
      %1434 = vsyncadd [#allocation3], %s1433
      %s1435 = sshll.u32 [#allocation2], 4
      %s1436 = int_to_ptr.vmem [resolvable:$true] %s1435
      %1441 = dma.vmem_to_hbm [thread:$0]  %s1436, 256, %s5, [#allocation3], 128, 128, 8
    $region25: #{model_forward.1} parent=1 // pred_fallthru
      _
    // Predicated region
    $region26: #{model_forward.1} parent=1 // pred_check
      _
    $region27: #{model_forward.1} parent=1 // pred_check_branch
      %1443 = sbr.rel (0) target = $region29
    $region28: #{model_forward.1} parent=1 // pred_region
      %1444 = dma.done [#allocation3], 256
    $region29: #{model_forward.1} parent=1 // pred_fallthru
      _
    %1445 = vsyncpa [#allocation3], 1

</llo_original>
